<compile_context>
chip_gen: v7x
topology: tpu7x:2x2x1
jax: 0.10.0
libtpu: 0.0.40
codegen_flags: <defaults>
</compile_context>

<pallas_src>
import numpy as np
import jax
import jax.numpy as jnp
from jax import lax
from jax.experimental import pallas as pl
from jax.experimental.pallas import tpu as pltpu

ALPHA = 0.5  # module parameter from __init__ (no trainable weights)


def _dft_matrix(n):
    """Symmetric DFT matrix F[k, m] = exp(-2*pi*i*k*m/n) in float64/complex128."""
    k = np.arange(n)
    return np.exp(-2.0j * np.pi * np.outer(k, k) / float(n))


def _pretraining_loss_kernel(pred_ref, target_ref, mask_ref, kre_ref, kim_ref,
                             part_ref):
    bb, pld = pred_ref.shape           # (bb, P*L*D)   lane-dense slab
    _, ld = mask_ref.shape             # (bb, L*D)
    P = pld // ld                      # static Python int

    diff = pred_ref[...] - target_ref[...]             # (bb, PLD) f32
    mask = mask_ref[...]                                # (bb, L*D) f32

    # Tile the (L*D)-flattened mask over the leading P axis of the (P, L, D)
    # flattening: flat index p*(L*D) + (l*D + d) -> mask[l, d].  Same pattern is
    # valid in the frequency domain (mask indexes the (L-freq, D-freq) bins,
    # uniform across the P-frequency axis).  Pure lane concat, no reshape.
    mask_full = jnp.concatenate([mask] * P, axis=-1)    # (bb, PLD)
    inv_p = jnp.float32(1.0 / P)

    # ---------------- time-domain MSE term (pure f32) ----------------
    # sum_{b,l,d} mask * mean_p(diff^2)  ==  sum(diff^2 * mask_full) / P
    time_num = jnp.sum(diff * diff * mask_full) * inv_p
    mask_sum = jnp.sum(mask)

    # ---------- frequency-domain MAE term (bf16 MXU, f32 accumulation) --------
    # Full 3-D DFT of the residual: diff_flat @ kron(F_P, F_L, F_D) (symmetric).
    diff_bf = diff.astype(jnp.bfloat16)
    re = jnp.dot(diff_bf, kre_ref[...], preferred_element_type=jnp.float32)
    im = jnp.dot(diff_bf, kim_ref[...], preferred_element_type=jnp.float32)
    mag = jnp.sqrt(re * re + im * im)                   # (bb, PLD)
    freq_num = jnp.sum(mag * mask_full) * inv_p

    # ---------------- emit per-block partial sums ----------------
    # Lane-aligned (8,128) tile; lanes 0/1/2 of row 0 hold the three partials.
    rows = lax.broadcasted_iota(jnp.int32, (8, 128), 0)
    cols = lax.broadcasted_iota(jnp.int32, (8, 128), 1)
    top = rows == 0
    tile = jnp.where(top & (cols == 0), time_num, 0.0)
    tile = tile + jnp.where(top & (cols == 1), freq_num, 0.0)
    tile = tile + jnp.where(top & (cols == 2), mask_sum, 0.0)
    part_ref[0] = tile.astype(jnp.float32)


def _vmem_capacity_bytes():
    """Per-core VMEM capacity; conservative fallback if the query is unavailable."""
    try:
        return int(pltpu.get_tpu_info().vmem_capacity_bytes)
    except Exception:
        return 64 << 20            # v7x per-TensorCore VMEM (smallest of the three)


def _pick_batch_block(batch, bytes_per_batch, vmem_cap):
    """Largest 'safe' divisor of batch under a per-generation block budget.

    Safe block sizes keep the (8,128) tiling rule trivially satisfied: the
    leading block dim is either a multiple of 8 or the full batch.  On
    small-VMEM parts (v7x: 64 MiB / TC, 2 TensorCores) prefer >= 2 grid steps
    so the "parallel" batch axis can be split across both cores.
    """
    small_vmem = vmem_cap <= (64 << 20)
    budget = (3 << 20) if small_vmem else (8 << 20)   # per pred/target block
    safe = [d for d in range(1, batch + 1)
            if batch % d == 0 and (d % 8 == 0 or d == batch)]
    fits = [d for d in safe if d * bytes_per_batch <= budget]
    if not fits:
        fits = [min(safe)]
    bb = max(fits)
    if small_vmem and batch >= 2:
        two_step = [d for d in fits if batch // d >= 2]
        if two_step:
            bb = max(two_step)
    return bb


def pretraining_loss(pred, target, mask, alpha=ALPHA):
    B, L, P, D = pred.shape
    LD = L * D
    PLD = P * LD

    # Permute to (B, P, L, D) and flatten (done by XLA outside the kernel) so the
    # P / P-frequency axis leads the flattened layout -> mask tiles by lane concat.
    pred2 = jnp.transpose(jnp.asarray(pred, jnp.float32), (0, 2, 1, 3)).reshape(B, PLD)
    target2 = jnp.transpose(jnp.asarray(target, jnp.float32), (0, 2, 1, 3)).reshape(B, PLD)
    mask2 = jnp.asarray(mask, jnp.float32).reshape(B, LD)

    # Full 3-D DFT matrix kron(F_P, F_L, F_D) (symmetric), bf16 for the MXU.
    # TODO(synk): fall back to a factored two-stage DFT when 2*(PLD)^2 bf16
    # constants no longer fit comfortably in VMEM (PLD >~ 2048).
    kron = np.kron(_dft_matrix(P), np.kron(_dft_matrix(L), _dft_matrix(D)))
    kron_re = jnp.asarray(kron.real, jnp.bfloat16)
    kron_im = jnp.asarray(kron.imag, jnp.bfloat16)

    vmem_cap = _vmem_capacity_bytes()
    bb = _pick_batch_block(B, 4 * PLD, vmem_cap)
    nb = B // bb

    # Explicit VMEM budget: pred/target/mask double-buffered, bf16 constants
    # (double-allocated; small enough that pipeline_mode=Buffered(1) is skipped
    # to keep the spec maximally portable), in-kernel f32 intermediates, slack.
    blk = 4 * bb * PLD
    est = (2 * 2 * blk                    # pred + target blocks, x2 buffers
           + 2 * 4 * bb * LD              # mask blocks, x2 buffers
           + 2 * 2 * 2 * PLD * PLD        # kron re+im, bf16, x2 buffers
           + 14 * blk                     # diff, diff_bf16, mask_full, re, im, mag, temps
           + (4 << 20))                   # slack
    cap = (52 << 20) if vmem_cap <= (64 << 20) else (100 << 20)
    vmem_limit = int(min(max(est, 32 << 20), cap))

    parts = pl.pallas_call(
        _pretraining_loss_kernel,
        out_shape=jax.ShapeDtypeStruct((nb, 8, 128), jnp.float32),
        grid_spec=pltpu.PrefetchScalarGridSpec(
            num_scalar_prefetch=0,
            grid=(nb,),
            in_specs=[
                pl.BlockSpec((bb, PLD), lambda b: (b, 0)),     # pred   (f32)
                pl.BlockSpec((bb, PLD), lambda b: (b, 0)),     # target (f32)
                pl.BlockSpec((bb, LD), lambda b: (b, 0)),      # mask   (f32)
                pl.BlockSpec((PLD, PLD), lambda b: (0, 0)),    # kron real (bf16)
                pl.BlockSpec((PLD, PLD), lambda b: (0, 0)),    # kron imag (bf16)
            ],
            out_specs=pl.BlockSpec((1, 8, 128), lambda b: (b, 0, 0)),
        ),
        compiler_params=pltpu.CompilerParams(
            dimension_semantics=("parallel",),
            vmem_limit_bytes=vmem_limit),
    )(pred2, target2, mask2, kron_re, kron_im)

    # Final reduction of per-block partials in the wrapper (cheap, exact f32).
    time_num = jnp.sum(parts[:, 0, 0])
    freq_num = jnp.sum(parts[:, 0, 1])
    mask_sum = jnp.sum(parts[:, 0, 2])
    return alpha * time_num / mask_sum + (1.0 - alpha) * freq_num / mask_sum


def _reference_loss(pred, target, mask, alpha=ALPHA):
    """Pure numpy (float64) re-implementation of the PyTorch forward."""
    pred = np.asarray(pred, np.float64)
    target = np.asarray(target, np.float64)
    mask = np.asarray(mask, np.float64)
    mse = (pred - target) ** 2
    time_loss = (mse.mean(axis=-2) * mask).sum() / mask.sum()
    pf = np.fft.fftn(pred, axes=(-3, -2, -1))
    tf = np.fft.fftn(target, axes=(-3, -2, -1))
    mae = np.abs(pf - tf)
    freq_loss = (mae.mean(axis=-2) * mask).sum() / mask.sum()
    return alpha * time_loss + (1.0 - alpha) * freq_loss


if __name__ == "__main__":
    B, L, P, D = 2, 8, 4, 16
    key = jax.random.PRNGKey(0)
    k1, k2, k3 = jax.random.split(key, 3)
    pred = jax.random.normal(k1, (B, L, P, D), dtype=jnp.float32)
    target = jax.random.normal(k2, (B, L, P, D), dtype=jnp.float32)
    mask = (jax.random.uniform(k3, (B, L, D)) < 0.5).astype(jnp.float32)

    loss = pretraining_loss(pred, target, mask)
    loss = jax.block_until_ready(loss)

    ref = _reference_loss(pred, target, mask)
    rel_err = abs(float(loss) - ref) / (abs(ref) + 1e-12)
    # bf16 MXU inputs with f32 accumulation -> slightly looser tolerance than a
    # pure-f32 path; any layout / DFT-logic bug would produce O(1) errors.
    assert rel_err < 2e-3, f"mismatch: kernel={float(loss)} ref={ref} rel_err={rel_err}"
    print("KERNEL_OK")
</pallas_src>

<mosaic_0001>
module attributes {stable_mosaic.version = 11 : i64} {
  func.func @_pretraining_loss_kernel(%arg0: i32, %arg1: memref<2x512xf32, #tpu.memory_space<vmem>>, %arg2: memref<2x512xf32, #tpu.memory_space<vmem>>, %arg3: memref<2x128xf32, #tpu.memory_space<vmem>>, %arg4: memref<512x512xbf16, #tpu.memory_space<vmem>>, %arg5: memref<512x512xbf16, #tpu.memory_space<vmem>>, %arg6: memref<1x8x128xf32, #tpu.memory_space<vmem>>) attributes {dimension_semantics = [#tpu.dimension_semantics<parallel>], iteration_bounds = array<i64: 1>, scalar_prefetch = 0 : i64, scratch_operands = 0 : i64, tpu.core_type = #tpu.core_type<tc>, window_params = [{transform_indices = @transform_0, window_bounds = array<i64: 2, 512>}, {transform_indices = @transform_1, window_bounds = array<i64: 2, 512>}, {transform_indices = @transform_2, window_bounds = array<i64: 2, 128>}, {pipeline_mode = #tpu.pipeline_mode<synchronous>, transform_indices = @transform_3, window_bounds = array<i64: 512, 512>}, {pipeline_mode = #tpu.pipeline_mode<synchronous>, transform_indices = @transform_4, window_bounds = array<i64: 512, 512>}, {transform_indices = @transform_5, window_bounds = array<i64: 1, 8, 128>}]} {
    %c0 = arith.constant 0 : index
    %c0_0 = arith.constant 0 : index
    %0 = vector.load %arg1[%c0, %c0_0] : memref<2x512xf32, #tpu.memory_space<vmem>>, vector<2x512xf32>
    %c0_1 = arith.constant 0 : index
    %c0_2 = arith.constant 0 : index
    %1 = vector.load %arg2[%c0_1, %c0_2] : memref<2x512xf32, #tpu.memory_space<vmem>>, vector<2x512xf32>
    %2 = arith.subf %0, %1 : vector<2x512xf32>
    %c0_3 = arith.constant 0 : index
    %c0_4 = arith.constant 0 : index
    %3 = vector.load %arg3[%c0_3, %c0_4] : memref<2x128xf32, #tpu.memory_space<vmem>>, vector<2x128xf32>
    %4 = tpu.concatenate %3, %3, %3, %3 in 1 : vector<2x128xf32>, vector<2x128xf32>, vector<2x128xf32>, vector<2x128xf32> -> vector<2x512xf32>
    %5 = arith.mulf %2, %2 : vector<2x512xf32>
    %6 = arith.mulf %5, %4 : vector<2x512xf32>
    %7 = vector.shape_cast %6 : vector<2x512xf32> to vector<1x2x512xf32>
    %cst = arith.constant dense<0.000000e+00> : vector<1xf32>
    %8 = vector.multi_reduction <add>, %7, %cst [1, 2] : vector<1x2x512xf32> to vector<1xf32>
    %9 = vector.shape_cast %8 : vector<1xf32> to vector<1x1x1xf32>
    %10 = vector.extract %9[0, 0, 0] : f32 from vector<1x1x1xf32>
    %cst_5 = arith.constant 2.500000e-01 : f32
    %11 = arith.mulf %10, %cst_5 : f32
    %12 = vector.shape_cast %3 : vector<2x128xf32> to vector<1x2x128xf32>
    %cst_6 = arith.constant dense<0.000000e+00> : vector<1xf32>
    %13 = vector.multi_reduction <add>, %12, %cst_6 [1, 2] : vector<1x2x128xf32> to vector<1xf32>
    %14 = vector.shape_cast %13 : vector<1xf32> to vector<1x1x1xf32>
    %15 = vector.extract %14[0, 0, 0] : f32 from vector<1x1x1xf32>
    %16 = arith.truncf %2 : vector<2x512xf32> to vector<2x512xbf16>
    %c0_7 = arith.constant 0 : index
    %c0_8 = arith.constant 0 : index
    %17 = vector.load %arg4[%c0_7, %c0_8] : memref<512x512xbf16, #tpu.memory_space<vmem>>, vector<512x512xbf16>
    %cst_9 = arith.constant dense<0.000000e+00> : vector<2x512xf32>
    %18 = tpu.matmul %16, %17, %cst_9 {dimension_numbers = #tpu.dot_dimension_numbers<[1], [0], [0], [1], [0, 0, 1, 1], [], []>} : vector<2x512xbf16>, vector<512x512xbf16>, vector<2x512xf32> -> vector<2x512xf32>
    %c0_10 = arith.constant 0 : index
    %c0_11 = arith.constant 0 : index
    %19 = vector.load %arg5[%c0_10, %c0_11] : memref<512x512xbf16, #tpu.memory_space<vmem>>, vector<512x512xbf16>
    %cst_12 = arith.constant dense<0.000000e+00> : vector<2x512xf32>
    %20 = tpu.matmul %16, %19, %cst_12 {dimension_numbers = #tpu.dot_dimension_numbers<[1], [0], [0], [1], [0, 0, 1, 1], [], []>} : vector<2x512xbf16>, vector<512x512xbf16>, vector<2x512xf32> -> vector<2x512xf32>
    %21 = arith.mulf %18, %18 : vector<2x512xf32>
    %22 = arith.mulf %20, %20 : vector<2x512xf32>
    %23 = arith.addf %21, %22 : vector<2x512xf32>
    %24 = math.sqrt %23 : vector<2x512xf32>
    %25 = arith.mulf %24, %4 : vector<2x512xf32>
    %26 = vector.shape_cast %25 : vector<2x512xf32> to vector<1x2x512xf32>
    %cst_13 = arith.constant dense<0.000000e+00> : vector<1xf32>
    %27 = vector.multi_reduction <add>, %26, %cst_13 [1, 2] : vector<1x2x512xf32> to vector<1xf32>
    %28 = vector.shape_cast %27 : vector<1xf32> to vector<1x1x1xf32>
    %29 = vector.extract %28[0, 0, 0] : f32 from vector<1x1x1xf32>
    %cst_14 = arith.constant 2.500000e-01 : f32
    %30 = arith.mulf %29, %cst_14 : f32
    %31 = tpu.iota {dimensions = array<i32: 0>} : vector<8x128xi32>
    %32 = tpu.iota {dimensions = array<i32: 1>} : vector<8x128xi32>
    %c0_i32 = arith.constant 0 : i32
    %33 = vector.broadcast %c0_i32 : i32 to vector<8x128xi32>
    %34 = arith.cmpi eq, %31, %33 : vector<8x128xi32>
    %c0_i32_15 = arith.constant 0 : i32
    %35 = vector.broadcast %c0_i32_15 : i32 to vector<8x128xi32>
    %36 = arith.cmpi eq, %32, %35 : vector<8x128xi32>
    %37 = arith.andi %34, %36 : vector<8x128xi1>
    %cst_16 = arith.constant 0.000000e+00 : f32
    %38 = vector.broadcast %11 : f32 to vector<8x128xf32>
    %39 = vector.broadcast %cst_16 : f32 to vector<8x128xf32>
    %40 = arith.select %37, %38, %39 : vector<8x128xi1>, vector<8x128xf32>
    %c1_i32 = arith.constant 1 : i32
    %41 = vector.broadcast %c1_i32 : i32 to vector<8x128xi32>
    %42 = arith.cmpi eq, %32, %41 : vector<8x128xi32>
    %43 = arith.andi %34, %42 : vector<8x128xi1>
    %cst_17 = arith.constant 0.000000e+00 : f32
    %44 = vector.broadcast %30 : f32 to vector<8x128xf32>
    %45 = vector.broadcast %cst_17 : f32 to vector<8x128xf32>
    %46 = arith.select %43, %44, %45 : vector<8x128xi1>, vector<8x128xf32>
    %47 = arith.addf %40, %46 : vector<8x128xf32>
    %c2_i32 = arith.constant 2 : i32
    %48 = vector.broadcast %c2_i32 : i32 to vector<8x128xi32>
    %49 = arith.cmpi eq, %32, %48 : vector<8x128xi32>
    %50 = arith.andi %34, %49 : vector<8x128xi1>
    %cst_18 = arith.constant 0.000000e+00 : f32
    %51 = vector.broadcast %15 : f32 to vector<8x128xf32>
    %52 = vector.broadcast %cst_18 : f32 to vector<8x128xf32>
    %53 = arith.select %50, %51, %52 : vector<8x128xi1>, vector<8x128xf32>
    %54 = arith.addf %47, %53 : vector<8x128xf32>
    %c0_19 = arith.constant 0 : index
    %c0_20 = arith.constant 0 : index
    %c0_21 = arith.constant 0 : index
    %55 = vector.load %arg6[%c0_19, %c0_20, %c0_21] : memref<1x8x128xf32, #tpu.memory_space<vmem>>, vector<1x8x128xf32>
    %56 = vector.shape_cast %55 : vector<1x8x128xf32> to vector<8x128xf32>
    %57 = vector.shape_cast %54 : vector<8x128xf32> to vector<1x8x128xf32>
    tpu.vector_store %arg6[%c0_19, %c0_20, %c0_21], %57 {strides = array<i32>} : memref<1x8x128xf32, #tpu.memory_space<vmem>>, vector<1x8x128xf32>,
    return
  }
  func.func @transform_0(%arg0: i32) -> (i32, i32) {
    %c0_i32 = arith.constant 0 : i32
    %c0_i32_0 = arith.constant 0 : i32
    return %arg0, %c0_i32 : i32, i32
  }
  func.func @transform_1(%arg0: i32) -> (i32, i32) {
    %c0_i32 = arith.constant 0 : i32
    %c0_i32_0 = arith.constant 0 : i32
    return %arg0, %c0_i32 : i32, i32
  }
  func.func @transform_2(%arg0: i32) -> (i32, i32) {
    %c0_i32 = arith.constant 0 : i32
    %c0_i32_0 = arith.constant 0 : i32
    return %arg0, %c0_i32 : i32, i32
  }
  func.func @transform_3(%arg0: i32) -> (i32, i32) {
    %c0_i32 = arith.constant 0 : i32
    %c0_i32_0 = arith.constant 0 : i32
    %c0_i32_1 = arith.constant 0 : i32
    return %c0_i32, %c0_i32_0 : i32, i32
  }
  func.func @transform_4(%arg0: i32) -> (i32, i32) {
    %c0_i32 = arith.constant 0 : i32
    %c0_i32_0 = arith.constant 0 : i32
    %c0_i32_1 = arith.constant 0 : i32
    return %c0_i32, %c0_i32_0 : i32, i32
  }
  func.func @transform_5(%arg0: i32) -> (i32, i32, i32) {
    %c0_i32 = arith.constant 0 : i32
    %c0_i32_0 = arith.constant 0 : i32
    %c0_i32_1 = arith.constant 0 : i32
    return %arg0, %c0_i32, %c0_i32_0 : i32, i32, i32
  }
}

</mosaic_0001>

<llo_original>
// kernel: tpu_custom_call.1
$region0: #{tpu_custom_call.1}
  #allocation0 [shape = 'u32[]', space=smem, size = 0x4, offset = 0x4, fixed_abs, tag = 'smem constant byte address 0x4 - core index']
  #allocation1 [shape = 'u32[144,128]{1,0:T(1,128)}', space=vmem, size = 0x12000, scoped, tag = 'internal scratch']
  %s0 = inlined_call_operand.hbm [shape: f32[2,512], index: 0, kind: input, shape index: {}]
  %s1 = inlined_call_operand.hbm [shape: f32[2,512], index: 1, kind: input, shape index: {}]
  %s2 = inlined_call_operand.vmem [shape: f32[2,128], index: 2, kind: input, shape index: {}]
  %s3 = inlined_call_operand.hbm [shape: bf16[512,512], index: 3, kind: input, shape index: {}]
  %s4 = inlined_call_operand.hbm [shape: bf16[512,512], index: 4, kind: input, shape index: {}]
  %s5 = inlined_call_operand.hbm [shape: f32[1,8,128], index: 5, kind: output, shape index: {}]
  %s6 = sld [smem:[#allocation0]]
  $region46: #{tpu_custom_call.1} parent=0
    _
  %s8 = ssub.s32 1, %s6
  %s9 = scalar_select 0, %s8, %s6
  $region1: #{tpu_custom_call.1} parent=0
    #allocation2 [shape = 'u8[4096]{0}', space=vmem, size = 0x1000, scoped, tag = 'input window, operand 0, single buffered']
    #allocation3 [shape = 's32[1]{0}', space=sflag, size = 0x4, scoped, tag = 'scoped memory for tpu_custom_call.1']
    #allocation4 [shape = 's32[1]{0}', space=sflag, size = 0x4, scoped, tag = 'scoped memory for tpu_custom_call.1']
    #allocation5 [shape = 'u8[4096]{0}', space=vmem, size = 0x1000, scoped, tag = 'input window, operand 1, single buffered']
    #allocation6 [shape = 's32[1]{0}', space=sflag, size = 0x4, scoped, tag = 'scoped memory for tpu_custom_call.1']
    #allocation7 [shape = 'u8[524288]{0}', space=vmem, size = 0x80000, scoped, tag = 'input window, operand 3, single buffered']
    #allocation8 [shape = 'u8[524288]{0}', space=vmem, size = 0x80000, scoped, tag = 'input window, operand 4, single buffered']
    #allocation9 [shape = 's32[1]{0}', space=sflag, size = 0x4, scoped, tag = 'scoped memory for tpu_custom_call.1']
    #allocation10 [shape = 'u8[4096]{0}', space=vmem, size = 0x1000, scoped, tag = 'output window, operand 0, single buffered']
    %10 = vsyncpa [#allocation3], 0
    %11 = vsyncpa [#allocation6], 0
    %12 = vsyncpa [#allocation9], 0
    %13 = vsyncpa [#allocation4], 0
    // Predicated region
    $region2: #{tpu_custom_call.1} parent=1 // pred_check
      _
    $region3: #{tpu_custom_call.1} parent=1 // pred_check_branch
      %15 = sbr.rel (0) target = $region5
    $region4: #{tpu_custom_call.1} parent=1 // pred_region
      %s17 = ssub.s32 128, 128
      %18 = vsyncadd [#allocation3], %s17
      %s20 = sshll.u32 [#allocation2], 4
      %s21 = int_to_ptr.vmem [resolvable:$true] %s20
      %23 = dma.hbm_to_vmem [thread:$0]  %s0, 128, %s21, [#allocation3]
    $region5: #{tpu_custom_call.1} parent=1 // pred_fallthru
      _
    // Predicated region
    $region6: #{tpu_custom_call.1} parent=1 // pred_check
      _
    $region7: #{tpu_custom_call.1} parent=1 // pred_check_branch
      %25 = sbr.rel (0) target = $region9
    $region8: #{tpu_custom_call.1} parent=1 // pred_region
      %s27 = ssub.s32 128, 128
      %28 = vsyncadd [#allocation6], %s27
      %s30 = sshll.u32 [#allocation5], 4
      %s31 = int_to_ptr.vmem [resolvable:$true] %s30
      %33 = dma.hbm_to_vmem [thread:$0]  %s1, 128, %s31, [#allocation6]
    $region9: #{tpu_custom_call.1} parent=1 // pred_fallthru
      _
    // Predicated region
    $region10: #{tpu_custom_call.1} parent=1 // pred_check
      _
    $region11: #{tpu_custom_call.1} parent=1 // pred_check_branch
      %35 = sbr.rel (0) target = $region13
    $region12: #{tpu_custom_call.1} parent=1 // pred_region
      _
    $region13: #{tpu_custom_call.1} parent=1 // pred_fallthru
      _
    // Predicated region
    $region14: #{tpu_custom_call.1} parent=1 // pred_check
      _
    $region15: #{tpu_custom_call.1} parent=1 // pred_check_branch
      %37 = sbr.rel (0) target = $region17
    $region16: #{tpu_custom_call.1} parent=1 // pred_region
      %s39 = ssub.s32 16384, 16384
      %40 = vsyncadd [#allocation6], %s39
      %s41 = sshll.u32 [#allocation7], 4
      %s42 = int_to_ptr.vmem [resolvable:$true] %s41
      %47 = dma.hbm_to_vmem [thread:$0]  %s3, 16384, %s42, [#allocation6], 256, 256, 16
    $region17: #{tpu_custom_call.1} parent=1 // pred_fallthru
      _
    // Predicated region
    $region18: #{tpu_custom_call.1} parent=1 // pred_check
      _
    $region19: #{tpu_custom_call.1} parent=1 // pred_check_branch
      %49 = sbr.rel (0) target = $region21
    $region20: #{tpu_custom_call.1} parent=1 // pred_region
      %s51 = ssub.s32 16384, 16384
      %52 = vsyncadd [#allocation9], %s51
      %s53 = sshll.u32 [#allocation8], 4
      %s54 = int_to_ptr.vmem [resolvable:$true] %s53
      %59 = dma.hbm_to_vmem [thread:$0]  %s4, 16384, %s54, [#allocation9], 256, 256, 16
    $region21: #{tpu_custom_call.1} parent=1 // pred_fallthru
      _
    // Predicated region
    $region22: #{tpu_custom_call.1} parent=1 // pred_check
      _
    $region23: #{tpu_custom_call.1} parent=1 // pred_check_branch
      %61 = sbr.rel (0) target = $region25
    $region24: #{tpu_custom_call.1} parent=1 // pred_region
      %62 = dma.done [#allocation3], 128
    $region25: #{tpu_custom_call.1} parent=1 // pred_fallthru
      _
    // Predicated region
    $region26: #{tpu_custom_call.1} parent=1 // pred_check
      _
    $region27: #{tpu_custom_call.1} parent=1 // pred_check_branch
      %64 = sbr.rel (0) target = $region29
    $region28: #{tpu_custom_call.1} parent=1 // pred_region
      %65 = dma.done [#allocation6], 128
    $region29: #{tpu_custom_call.1} parent=1 // pred_fallthru
      _
    // Predicated region
    $region30: #{tpu_custom_call.1} parent=1 // pred_check
      _
    $region31: #{tpu_custom_call.1} parent=1 // pred_check_branch
      %67 = sbr.rel (0) target = $region33
    $region32: #{tpu_custom_call.1} parent=1 // pred_region
      %68 = dma.done [#allocation6], 16384
    $region33: #{tpu_custom_call.1} parent=1 // pred_fallthru
      _
    // Predicated region
    $region34: #{tpu_custom_call.1} parent=1 // pred_check
      _
    $region35: #{tpu_custom_call.1} parent=1 // pred_check_branch
      %70 = sbr.rel (0) target = $region37
    $region36: #{tpu_custom_call.1} parent=1 // pred_region
      %71 = dma.done [#allocation9], 16384
    $region37: #{tpu_custom_call.1} parent=1 // pred_fallthru
      _
    %v72 = vld [vmem:[#allocation2] sm:$0xff]
    %v73 = vld [vmem:[#allocation5] sm:$0xff]
    %v74 = vsub.f32 %v72, %v73
    %v75 = vld [vmem:[%s2] sm:$0x3]
    %v76 = vmul.f32 %v74, %v74
    %v78 = vcombine.low %v75, %v75
    %v80 = vunpack.c.l.s4 1983009808
    %v81 = vunpack.c.0.s8 %v80
    %v82 = vlaneseq
    %v83 = vshrl.u32 %v82, 7
    %v84 = vsub.s32 %v81, %v83
    %v85 = vrot.slane %v78, %v84
    %v86 = vcombine.low %v85, %v85
    %v88 = vmul.f32 %v76, %v86
    %v90 = vcombine.high %v88, %v88
    %v92 = vunpack.c.l.s4 1983009808
    %v93 = vunpack.c.0.s8 %v92
    %v94 = vlaneseq
    %v95 = vshrl.u32 %v94, 7
    %v96 = vsub.s32 %v93, %v95
    %v97 = vrot.slane %v88, %v96
    %v99 = vunpack.c.l.s4 1983009808
    %v100 = vunpack.c.0.s8 %v99
    %v101 = vlaneseq
    %v102 = vshrl.u32 %v101, 7
    %v103 = vsub.s32 %v100, %v102
    %v104 = vrot.slane %v90, %v103
    %v105 = vcombine.high %v97, %v97
    %v106 = vcombine.high %v104, %v104
    %vm111 = vcmask 1041408
    %v112 = vsel %vm111, %v97, 0.0
    %v113 = vsel %vm111, %v105, 0.0
    %v114 = vadd.f32 %v112, %v113
    %v115 = vsel %vm111, %v104, 0.0
    %v116 = vadd.f32 %v114, %v115
    %v117 = vsel %vm111, %v106, 0.0
    %v118 = vadd.f32 %v116, %v117
    %119 = vadd.xlane.f32.xlu0 %v118
    %v120 = vpop.xlane.xlu0 %119
    %v121 = vrot.slane %v120, 4
    %v122 = vadd.f32 %v120, %v121
    %v123 = vrot.slane %v122, 2
    %v124 = vadd.f32 %v122, %v123
    %v125 = vrot.slane %v124, 1
    %v126 = vadd.f32 %v124, %v125
    %s127 = vtos %v126
    %s128 = smul.f32 %s127, 0.25
    %v129 = vsel %vm111, %v75, 0.0
    %130 = vadd.xlane.f32.xlu0 %v129
    %v131 = vpop.xlane.xlu0 %130
    %v132 = vrot.slane %v131, 4
    %v133 = vadd.f32 %v131, %v132
    %v134 = vrot.slane %v133, 2
    %v135 = vadd.f32 %v133, %v134
    %v136 = vrot.slane %v135, 1
    %v137 = vadd.f32 %v135, %v136
    %s138 = vtos %v137
    %v140 = vcombine.high %v74, %v74
    %v142 = vunpack.c.l.s4 1983009808
    %v143 = vunpack.c.0.s8 %v142
    %v144 = vlaneseq
    %v145 = vshrl.u32 %v144, 7
    %v146 = vsub.s32 %v143, %v145
    %v147 = vrot.slane %v74, %v146
    %v149 = vunpack.c.l.s4 1983009808
    %v150 = vunpack.c.0.s8 %v149
    %v151 = vlaneseq
    %v152 = vshrl.u32 %v151, 7
    %v153 = vsub.s32 %v150, %v152
    %v154 = vrot.slane %v140, %v153
    %v155 = vcombine.high %v147, %v147
    %v156 = vcombine.high %v154, %v154
    %v161 = vpack.c.bf16 %v147, %v147
    %v162 = vpack.c.bf16 %v155, %v155
    %v163 = vpack.c.bf16 %v154, %v154
    %v164 = vpack.c.bf16 %v156, %v156
    %v165 = vld [vmem:[#allocation7] sm:$0xff]
    %v166 = vld [vmem:[#allocation7 + $0x8] sm:$0xff]
    %v167 = vld [vmem:[#allocation7 + $0x10] sm:$0xff]
    %v168 = vld [vmem:[#allocation7 + $0x18] sm:$0xff]
    %v169 = vld [vmem:[#allocation7 + $0x20] sm:$0xff]
    %v170 = vld [vmem:[#allocation7 + $0x28] sm:$0xff]
    %v171 = vld [vmem:[#allocation7 + $0x30] sm:$0xff]
    %v172 = vld [vmem:[#allocation7 + $0x38] sm:$0xff]
    %v173 = vld [vmem:[#allocation7 + $0x40] sm:$0xff]
    %v174 = vld [vmem:[#allocation7 + $0x48] sm:$0xff]
    %v175 = vld [vmem:[#allocation7 + $0x50] sm:$0xff]
    %v176 = vld [vmem:[#allocation7 + $0x58] sm:$0xff]
    %v177 = vld [vmem:[#allocation7 + $0x60] sm:$0xff]
    %v178 = vld [vmem:[#allocation7 + $0x68] sm:$0xff]
    %v179 = vld [vmem:[#allocation7 + $0x70] sm:$0xff]
    %v180 = vld [vmem:[#allocation7 + $0x78] sm:$0xff]
    %v181 = vld [vmem:[#allocation7 + $0x80] sm:$0xff]
    %v182 = vld [vmem:[#allocation7 + $0x88] sm:$0xff]
    %v183 = vld [vmem:[#allocation7 + $0x90] sm:$0xff]
    %v184 = vld [vmem:[#allocation7 + $0x98] sm:$0xff]
    %v185 = vld [vmem:[#allocation7 + $0xa0] sm:$0xff]
    %v186 = vld [vmem:[#allocation7 + $0xa8] sm:$0xff]
    %v187 = vld [vmem:[#allocation7 + $0xb0] sm:$0xff]
    %v188 = vld [vmem:[#allocation7 + $0xb8] sm:$0xff]
    %v189 = vld [vmem:[#allocation7 + $0xc0] sm:$0xff]
    %v190 = vld [vmem:[#allocation7 + $0xc8] sm:$0xff]
    %v191 = vld [vmem:[#allocation7 + $0xd0] sm:$0xff]
    %v192 = vld [vmem:[#allocation7 + $0xd8] sm:$0xff]
    %v193 = vld [vmem:[#allocation7 + $0xe0] sm:$0xff]
    %v194 = vld [vmem:[#allocation7 + $0xe8] sm:$0xff]
    %v195 = vld [vmem:[#allocation7 + $0xf0] sm:$0xff]
    %v196 = vld [vmem:[#allocation7 + $0xf8] sm:$0xff]
    %v197 = vld [vmem:[#allocation7 + $0x100] sm:$0xff]
    %v198 = vld [vmem:[#allocation7 + $0x108] sm:$0xff]
    %v199 = vld [vmem:[#allocation7 + $0x110] sm:$0xff]
    %v200 = vld [vmem:[#allocation7 + $0x118] sm:$0xff]
    %v201 = vld [vmem:[#allocation7 + $0x120] sm:$0xff]
    %v202 = vld [vmem:[#allocation7 + $0x128] sm:$0xff]
    %v203 = vld [vmem:[#allocation7 + $0x130] sm:$0xff]
    %v204 = vld [vmem:[#allocation7 + $0x138] sm:$0xff]
    %v205 = vld [vmem:[#allocation7 + $0x140] sm:$0xff]
    %v206 = vld [vmem:[#allocation7 + $0x148] sm:$0xff]
    %v207 = vld [vmem:[#allocation7 + $0x150] sm:$0xff]
    %v208 = vld [vmem:[#allocation7 + $0x158] sm:$0xff]
    %v209 = vld [vmem:[#allocation7 + $0x160] sm:$0xff]
    %v210 = vld [vmem:[#allocation7 + $0x168] sm:$0xff]
    %v211 = vld [vmem:[#allocation7 + $0x170] sm:$0xff]
    %v212 = vld [vmem:[#allocation7 + $0x178] sm:$0xff]
    %v213 = vld [vmem:[#allocation7 + $0x180] sm:$0xff]
    %v214 = vld [vmem:[#allocation7 + $0x188] sm:$0xff]
    %v215 = vld [vmem:[#allocation7 + $0x190] sm:$0xff]
    %v216 = vld [vmem:[#allocation7 + $0x198] sm:$0xff]
    %v217 = vld [vmem:[#allocation7 + $0x1a0] sm:$0xff]
    %v218 = vld [vmem:[#allocation7 + $0x1a8] sm:$0xff]
    %v219 = vld [vmem:[#allocation7 + $0x1b0] sm:$0xff]
    %v220 = vld [vmem:[#allocation7 + $0x1b8] sm:$0xff]
    %v221 = vld [vmem:[#allocation7 + $0x1c0] sm:$0xff]
    %v222 = vld [vmem:[#allocation7 + $0x1c8] sm:$0xff]
    %v223 = vld [vmem:[#allocation7 + $0x1d0] sm:$0xff]
    %v224 = vld [vmem:[#allocation7 + $0x1d8] sm:$0xff]
    %v225 = vld [vmem:[#allocation7 + $0x1e0] sm:$0xff]
    %v226 = vld [vmem:[#allocation7 + $0x1e8] sm:$0xff]
    %v227 = vld [vmem:[#allocation7 + $0x1f0] sm:$0xff]
    %v228 = vld [vmem:[#allocation7 + $0x1f8] sm:$0xff]
    %v229 = vld [vmem:[#allocation7 + $0x200] sm:$0xff]
    %v230 = vld [vmem:[#allocation7 + $0x208] sm:$0xff]
    %v231 = vld [vmem:[#allocation7 + $0x210] sm:$0xff]
    %v232 = vld [vmem:[#allocation7 + $0x218] sm:$0xff]
    %v233 = vld [vmem:[#allocation7 + $0x220] sm:$0xff]
    %v234 = vld [vmem:[#allocation7 + $0x228] sm:$0xff]
    %v235 = vld [vmem:[#allocation7 + $0x230] sm:$0xff]
    %v236 = vld [vmem:[#allocation7 + $0x238] sm:$0xff]
    %v237 = vld [vmem:[#allocation7 + $0x240] sm:$0xff]
    %v238 = vld [vmem:[#allocation7 + $0x248] sm:$0xff]
    %v239 = vld [vmem:[#allocation7 + $0x250] sm:$0xff]
    %v240 = vld [vmem:[#allocation7 + $0x258] sm:$0xff]
    %v241 = vld [vmem:[#allocation7 + $0x260] sm:$0xff]
    %v242 = vld [vmem:[#allocation7 + $0x268] sm:$0xff]
    %v243 = vld [vmem:[#allocation7 + $0x270] sm:$0xff]
    %v244 = vld [vmem:[#allocation7 + $0x278] sm:$0xff]
    %v245 = vld [vmem:[#allocation7 + $0x280] sm:$0xff]
    %v246 = vld [vmem:[#allocation7 + $0x288] sm:$0xff]
    %v247 = vld [vmem:[#allocation7 + $0x290] sm:$0xff]
    %v248 = vld [vmem:[#allocation7 + $0x298] sm:$0xff]
    %v249 = vld [vmem:[#allocation7 + $0x2a0] sm:$0xff]
    %v250 = vld [vmem:[#allocation7 + $0x2a8] sm:$0xff]
    %v251 = vld [vmem:[#allocation7 + $0x2b0] sm:$0xff]
    %v252 = vld [vmem:[#allocation7 + $0x2b8] sm:$0xff]
    %v253 = vld [vmem:[#allocation7 + $0x2c0] sm:$0xff]
    %v254 = vld [vmem:[#allocation7 + $0x2c8] sm:$0xff]
    %v255 = vld [vmem:[#allocation7 + $0x2d0] sm:$0xff]
    %v256 = vld [vmem:[#allocation7 + $0x2d8] sm:$0xff]
    %v257 = vld [vmem:[#allocation7 + $0x2e0] sm:$0xff]
    %v258 = vld [vmem:[#allocation7 + $0x2e8] sm:$0xff]
    %v259 = vld [vmem:[#allocation7 + $0x2f0] sm:$0xff]
    %v260 = vld [vmem:[#allocation7 + $0x2f8] sm:$0xff]
    %v261 = vld [vmem:[#allocation7 + $0x300] sm:$0xff]
    %v262 = vld [vmem:[#allocation7 + $0x308] sm:$0xff]
    %v263 = vld [vmem:[#allocation7 + $0x310] sm:$0xff]
    %v264 = vld [vmem:[#allocation7 + $0x318] sm:$0xff]
    %v265 = vld [vmem:[#allocation7 + $0x320] sm:$0xff]
    %v266 = vld [vmem:[#allocation7 + $0x328] sm:$0xff]
    %v267 = vld [vmem:[#allocation7 + $0x330] sm:$0xff]
    %v268 = vld [vmem:[#allocation7 + $0x338] sm:$0xff]
    %v269 = vld [vmem:[#allocation7 + $0x340] sm:$0xff]
    %v270 = vld [vmem:[#allocation7 + $0x348] sm:$0xff]
    %v271 = vld [vmem:[#allocation7 + $0x350] sm:$0xff]
    %v272 = vld [vmem:[#allocation7 + $0x358] sm:$0xff]
    %v273 = vld [vmem:[#allocation7 + $0x360] sm:$0xff]
    %v274 = vld [vmem:[#allocation7 + $0x368] sm:$0xff]
    %v275 = vld [vmem:[#allocation7 + $0x370] sm:$0xff]
    %v276 = vld [vmem:[#allocation7 + $0x378] sm:$0xff]
    %v277 = vld [vmem:[#allocation7 + $0x380] sm:$0xff]
    %v278 = vld [vmem:[#allocation7 + $0x388] sm:$0xff]
    %v279 = vld [vmem:[#allocation7 + $0x390] sm:$0xff]
    %v280 = vld [vmem:[#allocation7 + $0x398] sm:$0xff]
    %v281 = vld [vmem:[#allocation7 + $0x3a0] sm:$0xff]
    %v282 = vld [vmem:[#allocation7 + $0x3a8] sm:$0xff]
    %v283 = vld [vmem:[#allocation7 + $0x3b0] sm:$0xff]
    %v284 = vld [vmem:[#allocation7 + $0x3b8] sm:$0xff]
    %v285 = vld [vmem:[#allocation7 + $0x3c0] sm:$0xff]
    %v286 = vld [vmem:[#allocation7 + $0x3c8] sm:$0xff]
    %v287 = vld [vmem:[#allocation7 + $0x3d0] sm:$0xff]
    %v288 = vld [vmem:[#allocation7 + $0x3d8] sm:$0xff]
    %v289 = vld [vmem:[#allocation7 + $0x3e0] sm:$0xff]
    %v290 = vld [vmem:[#allocation7 + $0x3e8] sm:$0xff]
    %v291 = vld [vmem:[#allocation7 + $0x3f0] sm:$0xff]
    %v292 = vld [vmem:[#allocation7 + $0x3f8] sm:$0xff]
    %v421 = vunpack.c.l.b16 %v165
    %v422 = vunpack.c.h.b16 %v165
    %v423 = vunpack.c.l.b16 %v166
    %v424 = vunpack.c.h.b16 %v166
    %v425 = vunpack.c.l.b16 %v167
    %v426 = vunpack.c.h.b16 %v167
    %v427 = vunpack.c.l.b16 %v168
    %v428 = vunpack.c.h.b16 %v168
    %v429 = vunpack.c.l.b16 %v169
    %v430 = vunpack.c.h.b16 %v169
    %v431 = vunpack.c.l.b16 %v170
    %v432 = vunpack.c.h.b16 %v170
    %v433 = vunpack.c.l.b16 %v171
    %v434 = vunpack.c.h.b16 %v171
    %v435 = vunpack.c.l.b16 %v172
    %v436 = vunpack.c.h.b16 %v172
    %v437 = vunpack.c.l.b16 %v173
    %v438 = vunpack.c.h.b16 %v173
    %v439 = vunpack.c.l.b16 %v174
    %v440 = vunpack.c.h.b16 %v174
    %v441 = vunpack.c.l.b16 %v175
    %v442 = vunpack.c.h.b16 %v175
    %v443 = vunpack.c.l.b16 %v176
    %v444 = vunpack.c.h.b16 %v176
    %v445 = vunpack.c.l.b16 %v177
    %v446 = vunpack.c.h.b16 %v177
    %v447 = vunpack.c.l.b16 %v178
    %v448 = vunpack.c.h.b16 %v178
    %v449 = vunpack.c.l.b16 %v179
    %v450 = vunpack.c.h.b16 %v179
    %v451 = vunpack.c.l.b16 %v180
    %v452 = vunpack.c.h.b16 %v180
    %v453 = vunpack.c.l.b16 %v181
    %v454 = vunpack.c.h.b16 %v181
    %v455 = vunpack.c.l.b16 %v182
    %v456 = vunpack.c.h.b16 %v182
    %v457 = vunpack.c.l.b16 %v183
    %v458 = vunpack.c.h.b16 %v183
    %v459 = vunpack.c.l.b16 %v184
    %v460 = vunpack.c.h.b16 %v184
    %v461 = vunpack.c.l.b16 %v185
    %v462 = vunpack.c.h.b16 %v185
    %v463 = vunpack.c.l.b16 %v186
    %v464 = vunpack.c.h.b16 %v186
    %v465 = vunpack.c.l.b16 %v187
    %v466 = vunpack.c.h.b16 %v187
    %v467 = vunpack.c.l.b16 %v188
    %v468 = vunpack.c.h.b16 %v188
    %v469 = vunpack.c.l.b16 %v189
    %v470 = vunpack.c.h.b16 %v189
    %v471 = vunpack.c.l.b16 %v190
    %v472 = vunpack.c.h.b16 %v190
    %v473 = vunpack.c.l.b16 %v191
    %v474 = vunpack.c.h.b16 %v191
    %v475 = vunpack.c.l.b16 %v192
    %v476 = vunpack.c.h.b16 %v192
    %v477 = vunpack.c.l.b16 %v193
    %v478 = vunpack.c.h.b16 %v193
    %v479 = vunpack.c.l.b16 %v194
    %v480 = vunpack.c.h.b16 %v194
    %v481 = vunpack.c.l.b16 %v195
    %v482 = vunpack.c.h.b16 %v195
    %v483 = vunpack.c.l.b16 %v196
    %v484 = vunpack.c.h.b16 %v196
    %v485 = vunpack.c.l.b16 %v197
    %v486 = vunpack.c.h.b16 %v197
    %v487 = vunpack.c.l.b16 %v198
    %v488 = vunpack.c.h.b16 %v198
    %v489 = vunpack.c.l.b16 %v199
    %v490 = vunpack.c.h.b16 %v199
    %v491 = vunpack.c.l.b16 %v200
    %v492 = vunpack.c.h.b16 %v200
    %v493 = vunpack.c.l.b16 %v201
    %v494 = vunpack.c.h.b16 %v201
    %v495 = vunpack.c.l.b16 %v202
    %v496 = vunpack.c.h.b16 %v202
    %v497 = vunpack.c.l.b16 %v203
    %v498 = vunpack.c.h.b16 %v203
    %v499 = vunpack.c.l.b16 %v204
    %v500 = vunpack.c.h.b16 %v204
    %v501 = vunpack.c.l.b16 %v205
    %v502 = vunpack.c.h.b16 %v205
    %v503 = vunpack.c.l.b16 %v206
    %v504 = vunpack.c.h.b16 %v206
    %v505 = vunpack.c.l.b16 %v207
    %v506 = vunpack.c.h.b16 %v207
    %v507 = vunpack.c.l.b16 %v208
    %v508 = vunpack.c.h.b16 %v208
    %v509 = vunpack.c.l.b16 %v209
    %v510 = vunpack.c.h.b16 %v209
    %v511 = vunpack.c.l.b16 %v210
    %v512 = vunpack.c.h.b16 %v210
    %v513 = vunpack.c.l.b16 %v211
    %v514 = vunpack.c.h.b16 %v211
    %v515 = vunpack.c.l.b16 %v212
    %v516 = vunpack.c.h.b16 %v212
    %v517 = vunpack.c.l.b16 %v213
    %v518 = vunpack.c.h.b16 %v213
    %v519 = vunpack.c.l.b16 %v214
    %v520 = vunpack.c.h.b16 %v214
    %v521 = vunpack.c.l.b16 %v215
    %v522 = vunpack.c.h.b16 %v215
    %v523 = vunpack.c.l.b16 %v216
    %v524 = vunpack.c.h.b16 %v216
    %v525 = vunpack.c.l.b16 %v217
    %v526 = vunpack.c.h.b16 %v217
    %v527 = vunpack.c.l.b16 %v218
    %v528 = vunpack.c.h.b16 %v218
    %v529 = vunpack.c.l.b16 %v219
    %v530 = vunpack.c.h.b16 %v219
    %v531 = vunpack.c.l.b16 %v220
    %v532 = vunpack.c.h.b16 %v220
    %v533 = vunpack.c.l.b16 %v221
    %v534 = vunpack.c.h.b16 %v221
    %v535 = vunpack.c.l.b16 %v222
    %v536 = vunpack.c.h.b16 %v222
    %v537 = vunpack.c.l.b16 %v223
    %v538 = vunpack.c.h.b16 %v223
    %v539 = vunpack.c.l.b16 %v224
    %v540 = vunpack.c.h.b16 %v224
    %v541 = vunpack.c.l.b16 %v225
    %v542 = vunpack.c.h.b16 %v225
    %v543 = vunpack.c.l.b16 %v226
    %v544 = vunpack.c.h.b16 %v226
    %v545 = vunpack.c.l.b16 %v227
    %v546 = vunpack.c.h.b16 %v227
    %v547 = vunpack.c.l.b16 %v228
    %v548 = vunpack.c.h.b16 %v228
    %v549 = vunpack.c.l.b16 %v229
    %v550 = vunpack.c.h.b16 %v229
    %v551 = vunpack.c.l.b16 %v230
    %v552 = vunpack.c.h.b16 %v230
    %v553 = vunpack.c.l.b16 %v231
    %v554 = vunpack.c.h.b16 %v231
    %v555 = vunpack.c.l.b16 %v232
    %v556 = vunpack.c.h.b16 %v232
    %v557 = vunpack.c.l.b16 %v233
    %v558 = vunpack.c.h.b16 %v233
    %v559 = vunpack.c.l.b16 %v234
    %v560 = vunpack.c.h.b16 %v234
    %v561 = vunpack.c.l.b16 %v235
    %v562 = vunpack.c.h.b16 %v235
    %v563 = vunpack.c.l.b16 %v236
    %v564 = vunpack.c.h.b16 %v236
    %v565 = vunpack.c.l.b16 %v237
    %v566 = vunpack.c.h.b16 %v237
    %v567 = vunpack.c.l.b16 %v238
    %v568 = vunpack.c.h.b16 %v238
    %v569 = vunpack.c.l.b16 %v239
    %v570 = vunpack.c.h.b16 %v239
    %v571 = vunpack.c.l.b16 %v240
    %v572 = vunpack.c.h.b16 %v240
    %v573 = vunpack.c.l.b16 %v241
    %v574 = vunpack.c.h.b16 %v241
    %v575 = vunpack.c.l.b16 %v242
    %v576 = vunpack.c.h.b16 %v242
    %v577 = vunpack.c.l.b16 %v243
    %v578 = vunpack.c.h.b16 %v243
    %v579 = vunpack.c.l.b16 %v244
    %v580 = vunpack.c.h.b16 %v244
    %v581 = vunpack.c.l.b16 %v245
    %v582 = vunpack.c.h.b16 %v245
    %v583 = vunpack.c.l.b16 %v246
    %v584 = vunpack.c.h.b16 %v246
    %v585 = vunpack.c.l.b16 %v247
    %v586 = vunpack.c.h.b16 %v247
    %v587 = vunpack.c.l.b16 %v248
    %v588 = vunpack.c.h.b16 %v248
    %v589 = vunpack.c.l.b16 %v249
    %v590 = vunpack.c.h.b16 %v249
    %v591 = vunpack.c.l.b16 %v250
    %v592 = vunpack.c.h.b16 %v250
    %v593 = vunpack.c.l.b16 %v251
    %v594 = vunpack.c.h.b16 %v251
    %v595 = vunpack.c.l.b16 %v252
    %v596 = vunpack.c.h.b16 %v252
    %v597 = vunpack.c.l.b16 %v253
    %v598 = vunpack.c.h.b16 %v253
    %v599 = vunpack.c.l.b16 %v254
    %v600 = vunpack.c.h.b16 %v254
    %v601 = vunpack.c.l.b16 %v255
    %v602 = vunpack.c.h.b16 %v255
    %v603 = vunpack.c.l.b16 %v256
    %v604 = vunpack.c.h.b16 %v256
    %v605 = vunpack.c.l.b16 %v257
    %v606 = vunpack.c.h.b16 %v257
    %v607 = vunpack.c.l.b16 %v258
    %v608 = vunpack.c.h.b16 %v258
    %v609 = vunpack.c.l.b16 %v259
    %v610 = vunpack.c.h.b16 %v259
    %v611 = vunpack.c.l.b16 %v260
    %v612 = vunpack.c.h.b16 %v260
    %v613 = vunpack.c.l.b16 %v261
    %v614 = vunpack.c.h.b16 %v261
    %v615 = vunpack.c.l.b16 %v262
    %v616 = vunpack.c.h.b16 %v262
    %v617 = vunpack.c.l.b16 %v263
    %v618 = vunpack.c.h.b16 %v263
    %v619 = vunpack.c.l.b16 %v264
    %v620 = vunpack.c.h.b16 %v264
    %v621 = vunpack.c.l.b16 %v265
    %v622 = vunpack.c.h.b16 %v265
    %v623 = vunpack.c.l.b16 %v266
    %v624 = vunpack.c.h.b16 %v266
    %v625 = vunpack.c.l.b16 %v267
    %v626 = vunpack.c.h.b16 %v267
    %v627 = vunpack.c.l.b16 %v268
    %v628 = vunpack.c.h.b16 %v268
    %v629 = vunpack.c.l.b16 %v269
    %v630 = vunpack.c.h.b16 %v269
    %v631 = vunpack.c.l.b16 %v270
    %v632 = vunpack.c.h.b16 %v270
    %v633 = vunpack.c.l.b16 %v271
    %v634 = vunpack.c.h.b16 %v271
    %v635 = vunpack.c.l.b16 %v272
    %v636 = vunpack.c.h.b16 %v272
    %v637 = vunpack.c.l.b16 %v273
    %v638 = vunpack.c.h.b16 %v273
    %v639 = vunpack.c.l.b16 %v274
    %v640 = vunpack.c.h.b16 %v274
    %v641 = vunpack.c.l.b16 %v275
    %v642 = vunpack.c.h.b16 %v275
    %v643 = vunpack.c.l.b16 %v276
    %v644 = vunpack.c.h.b16 %v276
    %v645 = vunpack.c.l.b16 %v277
    %v646 = vunpack.c.h.b16 %v277
    %v647 = vunpack.c.l.b16 %v278
    %v648 = vunpack.c.h.b16 %v278
    %v649 = vunpack.c.l.b16 %v279
    %v650 = vunpack.c.h.b16 %v279
    %v651 = vunpack.c.l.b16 %v280
    %v652 = vunpack.c.h.b16 %v280
    %v653 = vunpack.c.l.b16 %v281
    %v654 = vunpack.c.h.b16 %v281
    %v655 = vunpack.c.l.b16 %v282
    %v656 = vunpack.c.h.b16 %v282
    %v657 = vunpack.c.l.b16 %v283
    %v658 = vunpack.c.h.b16 %v283
    %v659 = vunpack.c.l.b16 %v284
    %v660 = vunpack.c.h.b16 %v284
    %v661 = vunpack.c.l.b16 %v285
    %v662 = vunpack.c.h.b16 %v285
    %v663 = vunpack.c.l.b16 %v286
    %v664 = vunpack.c.h.b16 %v286
    %v665 = vunpack.c.l.b16 %v287
    %v666 = vunpack.c.h.b16 %v287
    %v667 = vunpack.c.l.b16 %v288
    %v668 = vunpack.c.h.b16 %v288
    %v669 = vunpack.c.l.b16 %v289
    %v670 = vunpack.c.h.b16 %v289
    %v671 = vunpack.c.l.b16 %v290
    %v672 = vunpack.c.h.b16 %v290
    %v673 = vunpack.c.l.b16 %v291
    %v674 = vunpack.c.h.b16 %v291
    %v675 = vunpack.c.l.b16 %v292
    %v676 = vunpack.c.h.b16 %v292
    %v677 = vpack.c.b16 %v425, %v421
    %v678 = vpack.c.b16 %v426, %v422
    %v679 = vpack.c.b16 %v427, %v423
    %v680 = vpack.c.b16 %v428, %v424
    %v681 = vpack.c.b16 %v433, %v429
    %v682 = vpack.c.b16 %v434, %v430
    %v683 = vpack.c.b16 %v435, %v431
    %v684 = vpack.c.b16 %v436, %v432
    %v685 = vpack.c.b16 %v441, %v437
    %v686 = vpack.c.b16 %v442, %v438
    %v687 = vpack.c.b16 %v443, %v439
    %v688 = vpack.c.b16 %v444, %v440
    %v689 = vpack.c.b16 %v449, %v445
    %v690 = vpack.c.b16 %v450, %v446
    %v691 = vpack.c.b16 %v451, %v447
    %v692 = vpack.c.b16 %v452, %v448
    %v693 = vpack.c.b16 %v457, %v453
    %v694 = vpack.c.b16 %v458, %v454
    %v695 = vpack.c.b16 %v459, %v455
    %v696 = vpack.c.b16 %v460, %v456
    %v697 = vpack.c.b16 %v465, %v461
    %v698 = vpack.c.b16 %v466, %v462
    %v699 = vpack.c.b16 %v467, %v463
    %v700 = vpack.c.b16 %v468, %v464
    %v701 = vpack.c.b16 %v473, %v469
    %v702 = vpack.c.b16 %v474, %v470
    %v703 = vpack.c.b16 %v475, %v471
    %v704 = vpack.c.b16 %v476, %v472
    %v705 = vpack.c.b16 %v481, %v477
    %v706 = vpack.c.b16 %v482, %v478
    %v707 = vpack.c.b16 %v483, %v479
    %v708 = vpack.c.b16 %v484, %v480
    %v709 = vpack.c.b16 %v489, %v485
    %v710 = vpack.c.b16 %v490, %v486
    %v711 = vpack.c.b16 %v491, %v487
    %v712 = vpack.c.b16 %v492, %v488
    %v713 = vpack.c.b16 %v497, %v493
    %v714 = vpack.c.b16 %v498, %v494
    %v715 = vpack.c.b16 %v499, %v495
    %v716 = vpack.c.b16 %v500, %v496
    %v717 = vpack.c.b16 %v505, %v501
    %v718 = vpack.c.b16 %v506, %v502
    %v719 = vpack.c.b16 %v507, %v503
    %v720 = vpack.c.b16 %v508, %v504
    %v721 = vpack.c.b16 %v513, %v509
    %v722 = vpack.c.b16 %v514, %v510
    %v723 = vpack.c.b16 %v515, %v511
    %v724 = vpack.c.b16 %v516, %v512
    %v725 = vpack.c.b16 %v521, %v517
    %v726 = vpack.c.b16 %v522, %v518
    %v727 = vpack.c.b16 %v523, %v519
    %v728 = vpack.c.b16 %v524, %v520
    %v729 = vpack.c.b16 %v529, %v525
    %v730 = vpack.c.b16 %v530, %v526
    %v731 = vpack.c.b16 %v531, %v527
    %v732 = vpack.c.b16 %v532, %v528
    %v733 = vpack.c.b16 %v537, %v533
    %v734 = vpack.c.b16 %v538, %v534
    %v735 = vpack.c.b16 %v539, %v535
    %v736 = vpack.c.b16 %v540, %v536
    %v737 = vpack.c.b16 %v545, %v541
    %v738 = vpack.c.b16 %v546, %v542
    %v739 = vpack.c.b16 %v547, %v543
    %v740 = vpack.c.b16 %v548, %v544
    %v741 = vpack.c.b16 %v553, %v549
    %v742 = vpack.c.b16 %v554, %v550
    %v743 = vpack.c.b16 %v555, %v551
    %v744 = vpack.c.b16 %v556, %v552
    %v745 = vpack.c.b16 %v561, %v557
    %v746 = vpack.c.b16 %v562, %v558
    %v747 = vpack.c.b16 %v563, %v559
    %v748 = vpack.c.b16 %v564, %v560
    %v749 = vpack.c.b16 %v569, %v565
    %v750 = vpack.c.b16 %v570, %v566
    %v751 = vpack.c.b16 %v571, %v567
    %v752 = vpack.c.b16 %v572, %v568
    %v753 = vpack.c.b16 %v577, %v573
    %v754 = vpack.c.b16 %v578, %v574
    %v755 = vpack.c.b16 %v579, %v575
    %v756 = vpack.c.b16 %v580, %v576
    %v757 = vpack.c.b16 %v585, %v581
    %v758 = vpack.c.b16 %v586, %v582
    %v759 = vpack.c.b16 %v587, %v583
    %v760 = vpack.c.b16 %v588, %v584
    %v761 = vpack.c.b16 %v593, %v589
    %v762 = vpack.c.b16 %v594, %v590
    %v763 = vpack.c.b16 %v595, %v591
    %v764 = vpack.c.b16 %v596, %v592
    %v765 = vpack.c.b16 %v601, %v597
    %v766 = vpack.c.b16 %v602, %v598
    %v767 = vpack.c.b16 %v603, %v599
    %v768 = vpack.c.b16 %v604, %v600
    %v769 = vpack.c.b16 %v609, %v605
    %v770 = vpack.c.b16 %v610, %v606
    %v771 = vpack.c.b16 %v611, %v607
    %v772 = vpack.c.b16 %v612, %v608
    %v773 = vpack.c.b16 %v617, %v613
    %v774 = vpack.c.b16 %v618, %v614
    %v775 = vpack.c.b16 %v619, %v615
    %v776 = vpack.c.b16 %v620, %v616
    %v777 = vpack.c.b16 %v625, %v621
    %v778 = vpack.c.b16 %v626, %v622
    %v779 = vpack.c.b16 %v627, %v623
    %v780 = vpack.c.b16 %v628, %v624
    %v781 = vpack.c.b16 %v633, %v629
    %v782 = vpack.c.b16 %v634, %v630
    %v783 = vpack.c.b16 %v635, %v631
    %v784 = vpack.c.b16 %v636, %v632
    %v785 = vpack.c.b16 %v641, %v637
    %v786 = vpack.c.b16 %v642, %v638
    %v787 = vpack.c.b16 %v643, %v639
    %v788 = vpack.c.b16 %v644, %v640
    %v789 = vpack.c.b16 %v649, %v645
    %v790 = vpack.c.b16 %v650, %v646
    %v791 = vpack.c.b16 %v651, %v647
    %v792 = vpack.c.b16 %v652, %v648
    %v793 = vpack.c.b16 %v657, %v653
    %v794 = vpack.c.b16 %v658, %v654
    %v795 = vpack.c.b16 %v659, %v655
    %v796 = vpack.c.b16 %v660, %v656
    %v797 = vpack.c.b16 %v665, %v661
    %v798 = vpack.c.b16 %v666, %v662
    %v799 = vpack.c.b16 %v667, %v663
    %v800 = vpack.c.b16 %v668, %v664
    %v801 = vpack.c.b16 %v673, %v669
    %v802 = vpack.c.b16 %v674, %v670
    %v803 = vpack.c.b16 %v675, %v671
    %v804 = vpack.c.b16 %v676, %v672
    %933 = vmatprep.subr.bf16.mxu0 %v678
    %934 = vmatpush1.bf16.msra.mxu0 %v677
    %935 = vmatprep.subr.bf16.mxu0 %v682
    %936 = vmatpush1.bf16.msra.mxu0 %v681
    %937 = vmatprep.subr.bf16.mxu0 %v686
    %938 = vmatpush1.bf16.msra.mxu0 %v685
    %939 = vmatprep.subr.bf16.mxu0 %v690
    %940 = vmatpush1.bf16.msra.mxu0 %v689
    %941 = vmatprep.subr.bf16.mxu0 %v694
    %942 = vmatpush1.bf16.msra.mxu0 %v693
    %943 = vmatprep.subr.bf16.mxu0 %v698
    %944 = vmatpush1.bf16.msra.mxu0 %v697
    %945 = vmatprep.subr.bf16.mxu0 %v702
    %946 = vmatpush1.bf16.msra.mxu0 %v701
    %947 = vmatprep.subr.bf16.mxu0 %v706
    %948 = vmatpush1.bf16.msra.mxu0 %v705
    %949 = vmatprep.subr.bf16.mxu0 %v710
    %950 = vmatpush1.bf16.msra.mxu0 %v709
    %951 = vmatprep.subr.bf16.mxu0 %v714
    %952 = vmatpush1.bf16.msra.mxu0 %v713
    %953 = vmatprep.subr.bf16.mxu0 %v718
    %954 = vmatpush1.bf16.msra.mxu0 %v717
    %955 = vmatprep.subr.bf16.mxu0 %v722
    %956 = vmatpush1.bf16.msra.mxu0 %v721
    %957 = vmatprep.subr.bf16.mxu0 %v726
    %958 = vmatpush1.bf16.msra.mxu0 %v725
    %959 = vmatprep.subr.bf16.mxu0 %v730
    %960 = vmatpush1.bf16.msra.mxu0 %v729
    %961 = vmatprep.subr.bf16.mxu0 %v734
    %962 = vmatpush1.bf16.msra.mxu0 %v733
    %963 = vmatprep.subr.bf16.mxu0 %v738
    %964 = vmatpush1.bf16.msra.mxu0 %v737
    %965 = vmatprep.mubr.bf16.mxu0 %v162
    %966 = vmatmul.mubr.bf16.gmra.mrb[0].mxu0 %v161
    %v967 = vpop.f32.mrb[0].mxu0
    %v968 = vadd.f32 0.0, %v967
    %v969 = vpop.f32.mrb[0].mxu0
    %v970 = vadd.f32 0.0, %v969
    %v971 = vpop.f32.mrb[0].mxu0
    %v972 = vpop.f32.mrb[0].mxu0
    %973 = vdwg.mxu0
    %974 = vmatprep.subr.bf16.mxu0 %v742
    %975 = vmatpush1.bf16.msra.mxu0 %v741
    %976 = vmatprep.subr.bf16.mxu0 %v746
    %977 = vmatpush1.bf16.msra.mxu0 %v745
    %978 = vmatprep.subr.bf16.mxu0 %v750
    %979 = vmatpush1.bf16.msra.mxu0 %v749
    %980 = vmatprep.subr.bf16.mxu0 %v754
    %981 = vmatpush1.bf16.msra.mxu0 %v753
    %982 = vmatprep.subr.bf16.mxu0 %v758
    %983 = vmatpush1.bf16.msra.mxu0 %v757
    %984 = vmatprep.subr.bf16.mxu0 %v762
    %985 = vmatpush1.bf16.msra.mxu0 %v761
    %986 = vmatprep.subr.bf16.mxu0 %v766
    %987 = vmatpush1.bf16.msra.mxu0 %v765
    %988 = vmatprep.subr.bf16.mxu0 %v770
    %989 = vmatpush1.bf16.msra.mxu0 %v769
    %990 = vmatprep.subr.bf16.mxu0 %v774
    %991 = vmatpush1.bf16.msra.mxu0 %v773
    %992 = vmatprep.subr.bf16.mxu0 %v778
    %993 = vmatpush1.bf16.msra.mxu0 %v777
    %994 = vmatprep.subr.bf16.mxu0 %v782
    %995 = vmatpush1.bf16.msra.mxu0 %v781
    %996 = vmatprep.subr.bf16.mxu0 %v786
    %997 = vmatpush1.bf16.msra.mxu0 %v785
    %998 = vmatprep.subr.bf16.mxu0 %v790
    %999 = vmatpush1.bf16.msra.mxu0 %v789
    %1000 = vmatprep.subr.bf16.mxu0 %v794
    %1001 = vmatpush1.bf16.msra.mxu0 %v793
    %1002 = vmatprep.subr.bf16.mxu0 %v798
    %1003 = vmatpush1.bf16.msra.mxu0 %v797
    %1004 = vmatprep.subr.bf16.mxu0 %v802
    %1005 = vmatpush1.bf16.msra.mxu0 %v801
    %1006 = vmatprep.mubr.bf16.mxu0 %v164
    %1007 = vmatmul.mubr.bf16.gmra.mrb[0].mxu0 %v163
    %v1008 = vpop.f32.mrb[0].mxu0
    %v1009 = vadd.f32 %v968, %v1008
    %v1010 = vpop.f32.mrb[0].mxu0
    %v1011 = vadd.f32 %v970, %v1010
    %v1012 = vpop.f32.mrb[0].mxu0
    %v1013 = vpop.f32.mrb[0].mxu0
    %1014 = vdwg.mxu0
    %1015 = vmatprep.subr.bf16.mxu0 %v680
    %1016 = vmatpush1.bf16.msra.mxu0 %v679
    %1017 = vmatprep.subr.bf16.mxu0 %v684
    %1018 = vmatpush1.bf16.msra.mxu0 %v683
    %1019 = vmatprep.subr.bf16.mxu0 %v688
    %1020 = vmatpush1.bf16.msra.mxu0 %v687
    %1021 = vmatprep.subr.bf16.mxu0 %v692
    %1022 = vmatpush1.bf16.msra.mxu0 %v691
    %1023 = vmatprep.subr.bf16.mxu0 %v696
    %1024 = vmatpush1.bf16.msra.mxu0 %v695
    %1025 = vmatprep.subr.bf16.mxu0 %v700
    %1026 = vmatpush1.bf16.msra.mxu0 %v699
    %1027 = vmatprep.subr.bf16.mxu0 %v704
    %1028 = vmatpush1.bf16.msra.mxu0 %v703
    %1029 = vmatprep.subr.bf16.mxu0 %v708
    %1030 = vmatpush1.bf16.msra.mxu0 %v707
    %1031 = vmatprep.subr.bf16.mxu0 %v712
    %1032 = vmatpush1.bf16.msra.mxu0 %v711
    %1033 = vmatprep.subr.bf16.mxu0 %v716
    %1034 = vmatpush1.bf16.msra.mxu0 %v715
    %1035 = vmatprep.subr.bf16.mxu0 %v720
    %1036 = vmatpush1.bf16.msra.mxu0 %v719
    %1037 = vmatprep.subr.bf16.mxu0 %v724
    %1038 = vmatpush1.bf16.msra.mxu0 %v723
    %1039 = vmatprep.subr.bf16.mxu0 %v728
    %1040 = vmatpush1.bf16.msra.mxu0 %v727
    %1041 = vmatprep.subr.bf16.mxu0 %v732
    %1042 = vmatpush1.bf16.msra.mxu0 %v731
    %1043 = vmatprep.subr.bf16.mxu0 %v736
    %1044 = vmatpush1.bf16.msra.mxu0 %v735
    %1045 = vmatprep.subr.bf16.mxu0 %v740
    %1046 = vmatpush1.bf16.msra.mxu0 %v739
    %1047 = vmatprep.mubr.bf16.mxu0 %v162
    %1048 = vmatmul.mubr.bf16.gmra.mrb[0].mxu0 %v161
    %v1049 = vpop.f32.mrb[0].mxu0
    %v1050 = vadd.f32 0.0, %v1049
    %v1051 = vpop.f32.mrb[0].mxu0
    %v1052 = vadd.f32 0.0, %v1051
    %v1053 = vpop.f32.mrb[0].mxu0
    %v1054 = vpop.f32.mrb[0].mxu0
    %1055 = vdwg.mxu0
    %1056 = vmatprep.subr.bf16.mxu0 %v744
    %1057 = vmatpush1.bf16.msra.mxu0 %v743
    %1058 = vmatprep.subr.bf16.mxu0 %v748
    %1059 = vmatpush1.bf16.msra.mxu0 %v747
    %1060 = vmatprep.subr.bf16.mxu0 %v752
    %1061 = vmatpush1.bf16.msra.mxu0 %v751
    %1062 = vmatprep.subr.bf16.mxu0 %v756
    %1063 = vmatpush1.bf16.msra.mxu0 %v755
    %1064 = vmatprep.subr.bf16.mxu0 %v760
    %1065 = vmatpush1.bf16.msra.mxu0 %v759
    %1066 = vmatprep.subr.bf16.mxu0 %v764
    %1067 = vmatpush1.bf16.msra.mxu0 %v763
    %1068 = vmatprep.subr.bf16.mxu0 %v768
    %1069 = vmatpush1.bf16.msra.mxu0 %v767
    %1070 = vmatprep.subr.bf16.mxu0 %v772
    %1071 = vmatpush1.bf16.msra.mxu0 %v771
    %1072 = vmatprep.subr.bf16.mxu0 %v776
    %1073 = vmatpush1.bf16.msra.mxu0 %v775
    %1074 = vmatprep.subr.bf16.mxu0 %v780
    %1075 = vmatpush1.bf16.msra.mxu0 %v779
    %1076 = vmatprep.subr.bf16.mxu0 %v784
    %1077 = vmatpush1.bf16.msra.mxu0 %v783
    %1078 = vmatprep.subr.bf16.mxu0 %v788
    %1079 = vmatpush1.bf16.msra.mxu0 %v787
    %1080 = vmatprep.subr.bf16.mxu0 %v792
    %1081 = vmatpush1.bf16.msra.mxu0 %v791
    %1082 = vmatprep.subr.bf16.mxu0 %v796
    %1083 = vmatpush1.bf16.msra.mxu0 %v795
    %1084 = vmatprep.subr.bf16.mxu0 %v800
    %1085 = vmatpush1.bf16.msra.mxu0 %v799
    %1086 = vmatprep.subr.bf16.mxu0 %v804
    %1087 = vmatpush1.bf16.msra.mxu0 %v803
    %1088 = vmatprep.mubr.bf16.mxu0 %v164
    %1089 = vmatmul.mubr.bf16.gmra.mrb[0].mxu0 %v163
    %v1090 = vpop.f32.mrb[0].mxu0
    %v1091 = vadd.f32 %v1050, %v1090
    %v1092 = vpop.f32.mrb[0].mxu0
    %v1093 = vadd.f32 %v1052, %v1092
    %v1094 = vpop.f32.mrb[0].mxu0
    %v1095 = vpop.f32.mrb[0].mxu0
    %1096 = vdwg.mxu0
    %v1097 = vld [vmem:[#allocation8] sm:$0xff]
    %v1098 = vld [vmem:[#allocation8 + $0x8] sm:$0xff]
    %v1099 = vld [vmem:[#allocation8 + $0x10] sm:$0xff]
    %v1100 = vld [vmem:[#allocation8 + $0x18] sm:$0xff]
    %v1101 = vld [vmem:[#allocation8 + $0x20] sm:$0xff]
    %v1102 = vld [vmem:[#allocation8 + $0x28] sm:$0xff]
    %v1103 = vld [vmem:[#allocation8 + $0x30] sm:$0xff]
    %v1104 = vld [vmem:[#allocation8 + $0x38] sm:$0xff]
    %v1105 = vld [vmem:[#allocation8 + $0x40] sm:$0xff]
    %v1106 = vld [vmem:[#allocation8 + $0x48] sm:$0xff]
    %v1107 = vld [vmem:[#allocation8 + $0x50] sm:$0xff]
    %v1108 = vld [vmem:[#allocation8 + $0x58] sm:$0xff]
    %v1109 = vld [vmem:[#allocation8 + $0x60] sm:$0xff]
    %v1110 = vld [vmem:[#allocation8 + $0x68] sm:$0xff]
    %v1111 = vld [vmem:[#allocation8 + $0x70] sm:$0xff]
    %v1112 = vld [vmem:[#allocation8 + $0x78] sm:$0xff]
    %v1113 = vld [vmem:[#allocation8 + $0x80] sm:$0xff]
    %v1114 = vld [vmem:[#allocation8 + $0x88] sm:$0xff]
    %v1115 = vld [vmem:[#allocation8 + $0x90] sm:$0xff]
    %v1116 = vld [vmem:[#allocation8 + $0x98] sm:$0xff]
    %v1117 = vld [vmem:[#allocation8 + $0xa0] sm:$0xff]
    %v1118 = vld [vmem:[#allocation8 + $0xa8] sm:$0xff]
    %v1119 = vld [vmem:[#allocation8 + $0xb0] sm:$0xff]
    %v1120 = vld [vmem:[#allocation8 + $0xb8] sm:$0xff]
    %v1121 = vld [vmem:[#allocation8 + $0xc0] sm:$0xff]
    %v1122 = vld [vmem:[#allocation8 + $0xc8] sm:$0xff]
    %v1123 = vld [vmem:[#allocation8 + $0xd0] sm:$0xff]
    %v1124 = vld [vmem:[#allocation8 + $0xd8] sm:$0xff]
    %v1125 = vld [vmem:[#allocation8 + $0xe0] sm:$0xff]
    %v1126 = vld [vmem:[#allocation8 + $0xe8] sm:$0xff]
    %v1127 = vld [vmem:[#allocation8 + $0xf0] sm:$0xff]
    %v1128 = vld [vmem:[#allocation8 + $0xf8] sm:$0xff]
    %v1129 = vld [vmem:[#allocation8 + $0x100] sm:$0xff]
    %v1130 = vld [vmem:[#allocation8 + $0x108] sm:$0xff]
    %v1131 = vld [vmem:[#allocation8 + $0x110] sm:$0xff]
    %v1132 = vld [vmem:[#allocation8 + $0x118] sm:$0xff]
    %v1133 = vld [vmem:[#allocation8 + $0x120] sm:$0xff]
    %v1134 = vld [vmem:[#allocation8 + $0x128] sm:$0xff]
    %v1135 = vld [vmem:[#allocation8 + $0x130] sm:$0xff]
    %v1136 = vld [vmem:[#allocation8 + $0x138] sm:$0xff]
    %v1137 = vld [vmem:[#allocation8 + $0x140] sm:$0xff]
    %v1138 = vld [vmem:[#allocation8 + $0x148] sm:$0xff]
    %v1139 = vld [vmem:[#allocation8 + $0x150] sm:$0xff]
    %v1140 = vld [vmem:[#allocation8 + $0x158] sm:$0xff]
    %v1141 = vld [vmem:[#allocation8 + $0x160] sm:$0xff]
    %v1142 = vld [vmem:[#allocation8 + $0x168] sm:$0xff]
    %v1143 = vld [vmem:[#allocation8 + $0x170] sm:$0xff]
    %v1144 = vld [vmem:[#allocation8 + $0x178] sm:$0xff]
    %v1145 = vld [vmem:[#allocation8 + $0x180] sm:$0xff]
    %v1146 = vld [vmem:[#allocation8 + $0x188] sm:$0xff]
    %v1147 = vld [vmem:[#allocation8 + $0x190] sm:$0xff]
    %v1148 = vld [vmem:[#allocation8 + $0x198] sm:$0xff]
    %v1149 = vld [vmem:[#allocation8 + $0x1a0] sm:$0xff]
    %v1150 = vld [vmem:[#allocation8 + $0x1a8] sm:$0xff]
    %v1151 = vld [vmem:[#allocation8 + $0x1b0] sm:$0xff]
    %v1152 = vld [vmem:[#allocation8 + $0x1b8] sm:$0xff]
    %v1153 = vld [vmem:[#allocation8 + $0x1c0] sm:$0xff]
    %v1154 = vld [vmem:[#allocation8 + $0x1c8] sm:$0xff]
    %v1155 = vld [vmem:[#allocation8 + $0x1d0] sm:$0xff]
    %v1156 = vld [vmem:[#allocation8 + $0x1d8] sm:$0xff]
    %v1157 = vld [vmem:[#allocation8 + $0x1e0] sm:$0xff]
    %v1158 = vld [vmem:[#allocation8 + $0x1e8] sm:$0xff]
    %v1159 = vld [vmem:[#allocation8 + $0x1f0] sm:$0xff]
    %v1160 = vld [vmem:[#allocation8 + $0x1f8] sm:$0xff]
    %v1161 = vld [vmem:[#allocation8 + $0x200] sm:$0xff]
    %v1162 = vld [vmem:[#allocation8 + $0x208] sm:$0xff]
    %v1163 = vld [vmem:[#allocation8 + $0x210] sm:$0xff]
    %v1164 = vld [vmem:[#allocation8 + $0x218] sm:$0xff]
    %v1165 = vld [vmem:[#allocation8 + $0x220] sm:$0xff]
    %v1166 = vld [vmem:[#allocation8 + $0x228] sm:$0xff]
    %v1167 = vld [vmem:[#allocation8 + $0x230] sm:$0xff]
    %v1168 = vld [vmem:[#allocation8 + $0x238] sm:$0xff]
    %v1169 = vld [vmem:[#allocation8 + $0x240] sm:$0xff]
    %v1170 = vld [vmem:[#allocation8 + $0x248] sm:$0xff]
    %v1171 = vld [vmem:[#allocation8 + $0x250] sm:$0xff]
    %v1172 = vld [vmem:[#allocation8 + $0x258] sm:$0xff]
    %v1173 = vld [vmem:[#allocation8 + $0x260] sm:$0xff]
    %v1174 = vld [vmem:[#allocation8 + $0x268] sm:$0xff]
    %v1175 = vld [vmem:[#allocation8 + $0x270] sm:$0xff]
    %v1176 = vld [vmem:[#allocation8 + $0x278] sm:$0xff]
    %v1177 = vld [vmem:[#allocation8 + $0x280] sm:$0xff]
    %v1178 = vld [vmem:[#allocation8 + $0x288] sm:$0xff]
    %v1179 = vld [vmem:[#allocation8 + $0x290] sm:$0xff]
    %v1180 = vld [vmem:[#allocation8 + $0x298] sm:$0xff]
    %v1181 = vld [vmem:[#allocation8 + $0x2a0] sm:$0xff]
    %v1182 = vld [vmem:[#allocation8 + $0x2a8] sm:$0xff]
    %v1183 = vld [vmem:[#allocation8 + $0x2b0] sm:$0xff]
    %v1184 = vld [vmem:[#allocation8 + $0x2b8] sm:$0xff]
    %v1185 = vld [vmem:[#allocation8 + $0x2c0] sm:$0xff]
    %v1186 = vld [vmem:[#allocation8 + $0x2c8] sm:$0xff]
    %v1187 = vld [vmem:[#allocation8 + $0x2d0] sm:$0xff]
    %v1188 = vld [vmem:[#allocation8 + $0x2d8] sm:$0xff]
    %v1189 = vld [vmem:[#allocation8 + $0x2e0] sm:$0xff]
    %v1190 = vld [vmem:[#allocation8 + $0x2e8] sm:$0xff]
    %v1191 = vld [vmem:[#allocation8 + $0x2f0] sm:$0xff]
    %v1192 = vld [vmem:[#allocation8 + $0x2f8] sm:$0xff]
    %v1193 = vld [vmem:[#allocation8 + $0x300] sm:$0xff]
    %v1194 = vld [vmem:[#allocation8 + $0x308] sm:$0xff]
    %v1195 = vld [vmem:[#allocation8 + $0x310] sm:$0xff]
    %v1196 = vld [vmem:[#allocation8 + $0x318] sm:$0xff]
    %v1197 = vld [vmem:[#allocation8 + $0x320] sm:$0xff]
    %v1198 = vld [vmem:[#allocation8 + $0x328] sm:$0xff]
    %v1199 = vld [vmem:[#allocation8 + $0x330] sm:$0xff]
    %v1200 = vld [vmem:[#allocation8 + $0x338] sm:$0xff]
    %v1201 = vld [vmem:[#allocation8 + $0x340] sm:$0xff]
    %v1202 = vld [vmem:[#allocation8 + $0x348] sm:$0xff]
    %v1203 = vld [vmem:[#allocation8 + $0x350] sm:$0xff]
    %v1204 = vld [vmem:[#allocation8 + $0x358] sm:$0xff]
    %v1205 = vld [vmem:[#allocation8 + $0x360] sm:$0xff]
    %v1206 = vld [vmem:[#allocation8 + $0x368] sm:$0xff]
    %v1207 = vld [vmem:[#allocation8 + $0x370] sm:$0xff]
    %v1208 = vld [vmem:[#allocation8 + $0x378] sm:$0xff]
    %v1209 = vld [vmem:[#allocation8 + $0x380] sm:$0xff]
    %v1210 = vld [vmem:[#allocation8 + $0x388] sm:$0xff]
    %v1211 = vld [vmem:[#allocation8 + $0x390] sm:$0xff]
    %v1212 = vld [vmem:[#allocation8 + $0x398] sm:$0xff]
    %v1213 = vld [vmem:[#allocation8 + $0x3a0] sm:$0xff]
    %v1214 = vld [vmem:[#allocation8 + $0x3a8] sm:$0xff]
    %v1215 = vld [vmem:[#allocation8 + $0x3b0] sm:$0xff]
    %v1216 = vld [vmem:[#allocation8 + $0x3b8] sm:$0xff]
    %v1217 = vld [vmem:[#allocation8 + $0x3c0] sm:$0xff]
    %v1218 = vld [vmem:[#allocation8 + $0x3c8] sm:$0xff]
    %v1219 = vld [vmem:[#allocation8 + $0x3d0] sm:$0xff]
    %v1220 = vld [vmem:[#allocation8 + $0x3d8] sm:$0xff]
    %v1221 = vld [vmem:[#allocation8 + $0x3e0] sm:$0xff]
    %v1222 = vld [vmem:[#allocation8 + $0x3e8] sm:$0xff]
    %v1223 = vld [vmem:[#allocation8 + $0x3f0] sm:$0xff]
    %v1224 = vld [vmem:[#allocation8 + $0x3f8] sm:$0xff]
    %v1353 = vunpack.c.l.b16 %v1097
    %v1354 = vunpack.c.h.b16 %v1097
    %v1355 = vunpack.c.l.b16 %v1098
    %v1356 = vunpack.c.h.b16 %v1098
    %v1357 = vunpack.c.l.b16 %v1099
    %v1358 = vunpack.c.h.b16 %v1099
    %v1359 = vunpack.c.l.b16 %v1100
    %v1360 = vunpack.c.h.b16 %v1100
    %v1361 = vunpack.c.l.b16 %v1101
    %v1362 = vunpack.c.h.b16 %v1101
    %v1363 = vunpack.c.l.b16 %v1102
    %v1364 = vunpack.c.h.b16 %v1102
    %v1365 = vunpack.c.l.b16 %v1103
    %v1366 = vunpack.c.h.b16 %v1103
    %v1367 = vunpack.c.l.b16 %v1104
    %v1368 = vunpack.c.h.b16 %v1104
    %v1369 = vunpack.c.l.b16 %v1105
    %v1370 = vunpack.c.h.b16 %v1105
    %v1371 = vunpack.c.l.b16 %v1106
    %v1372 = vunpack.c.h.b16 %v1106
    %v1373 = vunpack.c.l.b16 %v1107
    %v1374 = vunpack.c.h.b16 %v1107
    %v1375 = vunpack.c.l.b16 %v1108
    %v1376 = vunpack.c.h.b16 %v1108
    %v1377 = vunpack.c.l.b16 %v1109
    %v1378 = vunpack.c.h.b16 %v1109
    %v1379 = vunpack.c.l.b16 %v1110
    %v1380 = vunpack.c.h.b16 %v1110
    %v1381 = vunpack.c.l.b16 %v1111
    %v1382 = vunpack.c.h.b16 %v1111
    %v1383 = vunpack.c.l.b16 %v1112
    %v1384 = vunpack.c.h.b16 %v1112
    %v1385 = vunpack.c.l.b16 %v1113
    %v1386 = vunpack.c.h.b16 %v1113
    %v1387 = vunpack.c.l.b16 %v1114
    %v1388 = vunpack.c.h.b16 %v1114
    %v1389 = vunpack.c.l.b16 %v1115
    %v1390 = vunpack.c.h.b16 %v1115
    %v1391 = vunpack.c.l.b16 %v1116
    %v1392 = vunpack.c.h.b16 %v1116
    %v1393 = vunpack.c.l.b16 %v1117
    %v1394 = vunpack.c.h.b16 %v1117
    %v1395 = vunpack.c.l.b16 %v1118
    %v1396 = vunpack.c.h.b16 %v1118
    %v1397 = vunpack.c.l.b16 %v1119
    %v1398 = vunpack.c.h.b16 %v1119
    %v1399 = vunpack.c.l.b16 %v1120
    %v1400 = vunpack.c.h.b16 %v1120
    %v1401 = vunpack.c.l.b16 %v1121
    %v1402 = vunpack.c.h.b16 %v1121
    %v1403 = vunpack.c.l.b16 %v1122
    %v1404 = vunpack.c.h.b16 %v1122
    %v1405 = vunpack.c.l.b16 %v1123
    %v1406 = vunpack.c.h.b16 %v1123
    %v1407 = vunpack.c.l.b16 %v1124
    %v1408 = vunpack.c.h.b16 %v1124
    %v1409 = vunpack.c.l.b16 %v1125
    %v1410 = vunpack.c.h.b16 %v1125
    %v1411 = vunpack.c.l.b16 %v1126
    %v1412 = vunpack.c.h.b16 %v1126
    %v1413 = vunpack.c.l.b16 %v1127
    %v1414 = vunpack.c.h.b16 %v1127
    %v1415 = vunpack.c.l.b16 %v1128
    %v1416 = vunpack.c.h.b16 %v1128
    %v1417 = vunpack.c.l.b16 %v1129
    %v1418 = vunpack.c.h.b16 %v1129
    %v1419 = vunpack.c.l.b16 %v1130
    %v1420 = vunpack.c.h.b16 %v1130
    %v1421 = vunpack.c.l.b16 %v1131
    %v1422 = vunpack.c.h.b16 %v1131
    %v1423 = vunpack.c.l.b16 %v1132
    %v1424 = vunpack.c.h.b16 %v1132
    %v1425 = vunpack.c.l.b16 %v1133
    %v1426 = vunpack.c.h.b16 %v1133
    %v1427 = vunpack.c.l.b16 %v1134
    %v1428 = vunpack.c.h.b16 %v1134
    %v1429 = vunpack.c.l.b16 %v1135
    %v1430 = vunpack.c.h.b16 %v1135
    %v1431 = vunpack.c.l.b16 %v1136
    %v1432 = vunpack.c.h.b16 %v1136
    %v1433 = vunpack.c.l.b16 %v1137
    %v1434 = vunpack.c.h.b16 %v1137
    %v1435 = vunpack.c.l.b16 %v1138
    %v1436 = vunpack.c.h.b16 %v1138
    %v1437 = vunpack.c.l.b16 %v1139
    %v1438 = vunpack.c.h.b16 %v1139
    %v1439 = vunpack.c.l.b16 %v1140
    %v1440 = vunpack.c.h.b16 %v1140
    %v1441 = vunpack.c.l.b16 %v1141
    %v1442 = vunpack.c.h.b16 %v1141
    %v1443 = vunpack.c.l.b16 %v1142
    %v1444 = vunpack.c.h.b16 %v1142
    %v1445 = vunpack.c.l.b16 %v1143
    %v1446 = vunpack.c.h.b16 %v1143
    %v1447 = vunpack.c.l.b16 %v1144
    %v1448 = vunpack.c.h.b16 %v1144
    %v1449 = vunpack.c.l.b16 %v1145
    %v1450 = vunpack.c.h.b16 %v1145
    %v1451 = vunpack.c.l.b16 %v1146
    %v1452 = vunpack.c.h.b16 %v1146
    %v1453 = vunpack.c.l.b16 %v1147
    %v1454 = vunpack.c.h.b16 %v1147
    %v1455 = vunpack.c.l.b16 %v1148
    %v1456 = vunpack.c.h.b16 %v1148
    %v1457 = vunpack.c.l.b16 %v1149
    %v1458 = vunpack.c.h.b16 %v1149
    %v1459 = vunpack.c.l.b16 %v1150
    %v1460 = vunpack.c.h.b16 %v1150
    %v1461 = vunpack.c.l.b16 %v1151
    %v1462 = vunpack.c.h.b16 %v1151
    %v1463 = vunpack.c.l.b16 %v1152
    %v1464 = vunpack.c.h.b16 %v1152
    %v1465 = vunpack.c.l.b16 %v1153
    %v1466 = vunpack.c.h.b16 %v1153
    %v1467 = vunpack.c.l.b16 %v1154
    %v1468 = vunpack.c.h.b16 %v1154
    %v1469 = vunpack.c.l.b16 %v1155
    %v1470 = vunpack.c.h.b16 %v1155
    %v1471 = vunpack.c.l.b16 %v1156
    %v1472 = vunpack.c.h.b16 %v1156
    %v1473 = vunpack.c.l.b16 %v1157
    %v1474 = vunpack.c.h.b16 %v1157
    %v1475 = vunpack.c.l.b16 %v1158
    %v1476 = vunpack.c.h.b16 %v1158
    %v1477 = vunpack.c.l.b16 %v1159
    %v1478 = vunpack.c.h.b16 %v1159
    %v1479 = vunpack.c.l.b16 %v1160
    %v1480 = vunpack.c.h.b16 %v1160
    %v1481 = vunpack.c.l.b16 %v1161
    %v1482 = vunpack.c.h.b16 %v1161
    %v1483 = vunpack.c.l.b16 %v1162
    %v1484 = vunpack.c.h.b16 %v1162
    %v1485 = vunpack.c.l.b16 %v1163
    %v1486 = vunpack.c.h.b16 %v1163
    %v1487 = vunpack.c.l.b16 %v1164
    %v1488 = vunpack.c.h.b16 %v1164
    %v1489 = vunpack.c.l.b16 %v1165
    %v1490 = vunpack.c.h.b16 %v1165
    %v1491 = vunpack.c.l.b16 %v1166
    %v1492 = vunpack.c.h.b16 %v1166
    %v1493 = vunpack.c.l.b16 %v1167
    %v1494 = vunpack.c.h.b16 %v1167
    %v1495 = vunpack.c.l.b16 %v1168
    %v1496 = vunpack.c.h.b16 %v1168
    %v1497 = vunpack.c.l.b16 %v1169
    %v1498 = vunpack.c.h.b16 %v1169
    %v1499 = vunpack.c.l.b16 %v1170
    %v1500 = vunpack.c.h.b16 %v1170
    %v1501 = vunpack.c.l.b16 %v1171
    %v1502 = vunpack.c.h.b16 %v1171
    %v1503 = vunpack.c.l.b16 %v1172
    %v1504 = vunpack.c.h.b16 %v1172
    %v1505 = vunpack.c.l.b16 %v1173
    %v1506 = vunpack.c.h.b16 %v1173
    %v1507 = vunpack.c.l.b16 %v1174
    %v1508 = vunpack.c.h.b16 %v1174
    %v1509 = vunpack.c.l.b16 %v1175
    %v1510 = vunpack.c.h.b16 %v1175
    %v1511 = vunpack.c.l.b16 %v1176
    %v1512 = vunpack.c.h.b16 %v1176
    %v1513 = vunpack.c.l.b16 %v1177
    %v1514 = vunpack.c.h.b16 %v1177
    %v1515 = vunpack.c.l.b16 %v1178
    %v1516 = vunpack.c.h.b16 %v1178
    %v1517 = vunpack.c.l.b16 %v1179
    %v1518 = vunpack.c.h.b16 %v1179
    %v1519 = vunpack.c.l.b16 %v1180
    %v1520 = vunpack.c.h.b16 %v1180
    %v1521 = vunpack.c.l.b16 %v1181
    %v1522 = vunpack.c.h.b16 %v1181
    %v1523 = vunpack.c.l.b16 %v1182
    %v1524 = vunpack.c.h.b16 %v1182
    %v1525 = vunpack.c.l.b16 %v1183
    %v1526 = vunpack.c.h.b16 %v1183
    %v1527 = vunpack.c.l.b16 %v1184
    %v1528 = vunpack.c.h.b16 %v1184
    %v1529 = vunpack.c.l.b16 %v1185
    %v1530 = vunpack.c.h.b16 %v1185
    %v1531 = vunpack.c.l.b16 %v1186
    %v1532 = vunpack.c.h.b16 %v1186
    %v1533 = vunpack.c.l.b16 %v1187
    %v1534 = vunpack.c.h.b16 %v1187
    %v1535 = vunpack.c.l.b16 %v1188
    %v1536 = vunpack.c.h.b16 %v1188
    %v1537 = vunpack.c.l.b16 %v1189
    %v1538 = vunpack.c.h.b16 %v1189
    %v1539 = vunpack.c.l.b16 %v1190
    %v1540 = vunpack.c.h.b16 %v1190
    %v1541 = vunpack.c.l.b16 %v1191
    %v1542 = vunpack.c.h.b16 %v1191
    %v1543 = vunpack.c.l.b16 %v1192
    %v1544 = vunpack.c.h.b16 %v1192
    %v1545 = vunpack.c.l.b16 %v1193
    %v1546 = vunpack.c.h.b16 %v1193
    %v1547 = vunpack.c.l.b16 %v1194
    %v1548 = vunpack.c.h.b16 %v1194
    %v1549 = vunpack.c.l.b16 %v1195
    %v1550 = vunpack.c.h.b16 %v1195
    %v1551 = vunpack.c.l.b16 %v1196
    %v1552 = vunpack.c.h.b16 %v1196
    %v1553 = vunpack.c.l.b16 %v1197
    %v1554 = vunpack.c.h.b16 %v1197
    %v1555 = vunpack.c.l.b16 %v1198
    %v1556 = vunpack.c.h.b16 %v1198
    %v1557 = vunpack.c.l.b16 %v1199
    %v1558 = vunpack.c.h.b16 %v1199
    %v1559 = vunpack.c.l.b16 %v1200
    %v1560 = vunpack.c.h.b16 %v1200
    %v1561 = vunpack.c.l.b16 %v1201
    %v1562 = vunpack.c.h.b16 %v1201
    %v1563 = vunpack.c.l.b16 %v1202
    %v1564 = vunpack.c.h.b16 %v1202
    %v1565 = vunpack.c.l.b16 %v1203
    %v1566 = vunpack.c.h.b16 %v1203
    %v1567 = vunpack.c.l.b16 %v1204
    %v1568 = vunpack.c.h.b16 %v1204
    %v1569 = vunpack.c.l.b16 %v1205
    %v1570 = vunpack.c.h.b16 %v1205
    %v1571 = vunpack.c.l.b16 %v1206
    %v1572 = vunpack.c.h.b16 %v1206
    %v1573 = vunpack.c.l.b16 %v1207
    %v1574 = vunpack.c.h.b16 %v1207
    %v1575 = vunpack.c.l.b16 %v1208
    %v1576 = vunpack.c.h.b16 %v1208
    %v1577 = vunpack.c.l.b16 %v1209
    %v1578 = vunpack.c.h.b16 %v1209
    %v1579 = vunpack.c.l.b16 %v1210
    %v1580 = vunpack.c.h.b16 %v1210
    %v1581 = vunpack.c.l.b16 %v1211
    %v1582 = vunpack.c.h.b16 %v1211
    %v1583 = vunpack.c.l.b16 %v1212
    %v1584 = vunpack.c.h.b16 %v1212
    %v1585 = vunpack.c.l.b16 %v1213
    %v1586 = vunpack.c.h.b16 %v1213
    %v1587 = vunpack.c.l.b16 %v1214
    %v1588 = vunpack.c.h.b16 %v1214
    %v1589 = vunpack.c.l.b16 %v1215
    %v1590 = vunpack.c.h.b16 %v1215
    %v1591 = vunpack.c.l.b16 %v1216
    %v1592 = vunpack.c.h.b16 %v1216
    %v1593 = vunpack.c.l.b16 %v1217
    %v1594 = vunpack.c.h.b16 %v1217
    %v1595 = vunpack.c.l.b16 %v1218
    %v1596 = vunpack.c.h.b16 %v1218
    %v1597 = vunpack.c.l.b16 %v1219
    %v1598 = vunpack.c.h.b16 %v1219
    %v1599 = vunpack.c.l.b16 %v1220
    %v1600 = vunpack.c.h.b16 %v1220
    %v1601 = vunpack.c.l.b16 %v1221
    %v1602 = vunpack.c.h.b16 %v1221
    %v1603 = vunpack.c.l.b16 %v1222
    %v1604 = vunpack.c.h.b16 %v1222
    %v1605 = vunpack.c.l.b16 %v1223
    %v1606 = vunpack.c.h.b16 %v1223
    %v1607 = vunpack.c.l.b16 %v1224
    %v1608 = vunpack.c.h.b16 %v1224
    %v1609 = vpack.c.b16 %v1357, %v1353
    %v1610 = vpack.c.b16 %v1358, %v1354
    %v1611 = vpack.c.b16 %v1359, %v1355
    %v1612 = vpack.c.b16 %v1360, %v1356
    %v1613 = vpack.c.b16 %v1365, %v1361
    %v1614 = vpack.c.b16 %v1366, %v1362
    %v1615 = vpack.c.b16 %v1367, %v1363
    %v1616 = vpack.c.b16 %v1368, %v1364
    %v1617 = vpack.c.b16 %v1373, %v1369
    %v1618 = vpack.c.b16 %v1374, %v1370
    %v1619 = vpack.c.b16 %v1375, %v1371
    %v1620 = vpack.c.b16 %v1376, %v1372
    %v1621 = vpack.c.b16 %v1381, %v1377
    %v1622 = vpack.c.b16 %v1382, %v1378
    %v1623 = vpack.c.b16 %v1383, %v1379
    %v1624 = vpack.c.b16 %v1384, %v1380
    %v1625 = vpack.c.b16 %v1389, %v1385
    %v1626 = vpack.c.b16 %v1390, %v1386
    %v1627 = vpack.c.b16 %v1391, %v1387
    %v1628 = vpack.c.b16 %v1392, %v1388
    %v1629 = vpack.c.b16 %v1397, %v1393
    %v1630 = vpack.c.b16 %v1398, %v1394
    %v1631 = vpack.c.b16 %v1399, %v1395
    %v1632 = vpack.c.b16 %v1400, %v1396
    %v1633 = vpack.c.b16 %v1405, %v1401
    %v1634 = vpack.c.b16 %v1406, %v1402
    %v1635 = vpack.c.b16 %v1407, %v1403
    %v1636 = vpack.c.b16 %v1408, %v1404
    %v1637 = vpack.c.b16 %v1413, %v1409
    %v1638 = vpack.c.b16 %v1414, %v1410
    %v1639 = vpack.c.b16 %v1415, %v1411
    %v1640 = vpack.c.b16 %v1416, %v1412
    %v1641 = vpack.c.b16 %v1421, %v1417
    %v1642 = vpack.c.b16 %v1422, %v1418
    %v1643 = vpack.c.b16 %v1423, %v1419
    %v1644 = vpack.c.b16 %v1424, %v1420
    %v1645 = vpack.c.b16 %v1429, %v1425
    %v1646 = vpack.c.b16 %v1430, %v1426
    %v1647 = vpack.c.b16 %v1431, %v1427
    %v1648 = vpack.c.b16 %v1432, %v1428
    %v1649 = vpack.c.b16 %v1437, %v1433
    %v1650 = vpack.c.b16 %v1438, %v1434
    %v1651 = vpack.c.b16 %v1439, %v1435
    %v1652 = vpack.c.b16 %v1440, %v1436
    %v1653 = vpack.c.b16 %v1445, %v1441
    %v1654 = vpack.c.b16 %v1446, %v1442
    %v1655 = vpack.c.b16 %v1447, %v1443
    %v1656 = vpack.c.b16 %v1448, %v1444
    %v1657 = vpack.c.b16 %v1453, %v1449
    %v1658 = vpack.c.b16 %v1454, %v1450
    %v1659 = vpack.c.b16 %v1455, %v1451
    %v1660 = vpack.c.b16 %v1456, %v1452
    %v1661 = vpack.c.b16 %v1461, %v1457
    %v1662 = vpack.c.b16 %v1462, %v1458
    %v1663 = vpack.c.b16 %v1463, %v1459
    %v1664 = vpack.c.b16 %v1464, %v1460
    %v1665 = vpack.c.b16 %v1469, %v1465
    %v1666 = vpack.c.b16 %v1470, %v1466
    %v1667 = vpack.c.b16 %v1471, %v1467
    %v1668 = vpack.c.b16 %v1472, %v1468
    %v1669 = vpack.c.b16 %v1477, %v1473
    %v1670 = vpack.c.b16 %v1478, %v1474
    %v1671 = vpack.c.b16 %v1479, %v1475
    %v1672 = vpack.c.b16 %v1480, %v1476
    %v1673 = vpack.c.b16 %v1485, %v1481
    %v1674 = vpack.c.b16 %v1486, %v1482
    %v1675 = vpack.c.b16 %v1487, %v1483
    %v1676 = vpack.c.b16 %v1488, %v1484
    %v1677 = vpack.c.b16 %v1493, %v1489
    %v1678 = vpack.c.b16 %v1494, %v1490
    %v1679 = vpack.c.b16 %v1495, %v1491
    %v1680 = vpack.c.b16 %v1496, %v1492
    %v1681 = vpack.c.b16 %v1501, %v1497
    %v1682 = vpack.c.b16 %v1502, %v1498
    %v1683 = vpack.c.b16 %v1503, %v1499
    %v1684 = vpack.c.b16 %v1504, %v1500
    %v1685 = vpack.c.b16 %v1509, %v1505
    %v1686 = vpack.c.b16 %v1510, %v1506
    %v1687 = vpack.c.b16 %v1511, %v1507
    %v1688 = vpack.c.b16 %v1512, %v1508
    %v1689 = vpack.c.b16 %v1517, %v1513
    %v1690 = vpack.c.b16 %v1518, %v1514
    %v1691 = vpack.c.b16 %v1519, %v1515
    %v1692 = vpack.c.b16 %v1520, %v1516
    %v1693 = vpack.c.b16 %v1525, %v1521
    %v1694 = vpack.c.b16 %v1526, %v1522
    %v1695 = vpack.c.b16 %v1527, %v1523
    %v1696 = vpack.c.b16 %v1528, %v1524
    %v1697 = vpack.c.b16 %v1533, %v1529
    %v1698 = vpack.c.b16 %v1534, %v1530
    %v1699 = vpack.c.b16 %v1535, %v1531
    %v1700 = vpack.c.b16 %v1536, %v1532
    %v1701 = vpack.c.b16 %v1541, %v1537
    %v1702 = vpack.c.b16 %v1542, %v1538
    %v1703 = vpack.c.b16 %v1543, %v1539
    %v1704 = vpack.c.b16 %v1544, %v1540
    %v1705 = vpack.c.b16 %v1549, %v1545
    %v1706 = vpack.c.b16 %v1550, %v1546
    %v1707 = vpack.c.b16 %v1551, %v1547
    %v1708 = vpack.c.b16 %v1552, %v1548
    %v1709 = vpack.c.b16 %v1557, %v1553
    %v1710 = vpack.c.b16 %v1558, %v1554
    %v1711 = vpack.c.b16 %v1559, %v1555
    %v1712 = vpack.c.b16 %v1560, %v1556
    %v1713 = vpack.c.b16 %v1565, %v1561
    %v1714 = vpack.c.b16 %v1566, %v1562
    %v1715 = vpack.c.b16 %v1567, %v1563
    %v1716 = vpack.c.b16 %v1568, %v1564
    %v1717 = vpack.c.b16 %v1573, %v1569
    %v1718 = vpack.c.b16 %v1574, %v1570
    %v1719 = vpack.c.b16 %v1575, %v1571
    %v1720 = vpack.c.b16 %v1576, %v1572
    %v1721 = vpack.c.b16 %v1581, %v1577
    %v1722 = vpack.c.b16 %v1582, %v1578
    %v1723 = vpack.c.b16 %v1583, %v1579
    %v1724 = vpack.c.b16 %v1584, %v1580
    %v1725 = vpack.c.b16 %v1589, %v1585
    %v1726 = vpack.c.b16 %v1590, %v1586
    %v1727 = vpack.c.b16 %v1591, %v1587
    %v1728 = vpack.c.b16 %v1592, %v1588
    %v1729 = vpack.c.b16 %v1597, %v1593
    %v1730 = vpack.c.b16 %v1598, %v1594
    %v1731 = vpack.c.b16 %v1599, %v1595
    %v1732 = vpack.c.b16 %v1600, %v1596
    %v1733 = vpack.c.b16 %v1605, %v1601
    %v1734 = vpack.c.b16 %v1606, %v1602
    %v1735 = vpack.c.b16 %v1607, %v1603
    %v1736 = vpack.c.b16 %v1608, %v1604
    %1865 = vmatprep.subr.bf16.mxu0 %v1610
    %1866 = vmatpush1.bf16.msra.mxu0 %v1609
    %1867 = vmatprep.subr.bf16.mxu0 %v1614
    %1868 = vmatpush1.bf16.msra.mxu0 %v1613
    %1869 = vmatprep.subr.bf16.mxu0 %v1618
    %1870 = vmatpush1.bf16.msra.mxu0 %v1617
    %1871 = vmatprep.subr.bf16.mxu0 %v1622
    %1872 = vmatpush1.bf16.msra.mxu0 %v1621
    %1873 = vmatprep.subr.bf16.mxu0 %v1626
    %1874 = vmatpush1.bf16.msra.mxu0 %v1625
    %1875 = vmatprep.subr.bf16.mxu0 %v1630
    %1876 = vmatpush1.bf16.msra.mxu0 %v1629
    %1877 = vmatprep.subr.bf16.mxu0 %v1634
    %1878 = vmatpush1.bf16.msra.mxu0 %v1633
    %1879 = vmatprep.subr.bf16.mxu0 %v1638
    %1880 = vmatpush1.bf16.msra.mxu0 %v1637
    %1881 = vmatprep.subr.bf16.mxu0 %v1642
    %1882 = vmatpush1.bf16.msra.mxu0 %v1641
    %1883 = vmatprep.subr.bf16.mxu0 %v1646
    %1884 = vmatpush1.bf16.msra.mxu0 %v1645
    %1885 = vmatprep.subr.bf16.mxu0 %v1650
    %1886 = vmatpush1.bf16.msra.mxu0 %v1649
    %1887 = vmatprep.subr.bf16.mxu0 %v1654
    %1888 = vmatpush1.bf16.msra.mxu0 %v1653
    %1889 = vmatprep.subr.bf16.mxu0 %v1658
    %1890 = vmatpush1.bf16.msra.mxu0 %v1657
    %1891 = vmatprep.subr.bf16.mxu0 %v1662
    %1892 = vmatpush1.bf16.msra.mxu0 %v1661
    %1893 = vmatprep.subr.bf16.mxu0 %v1666
    %1894 = vmatpush1.bf16.msra.mxu0 %v1665
    %1895 = vmatprep.subr.bf16.mxu0 %v1670
    %1896 = vmatpush1.bf16.msra.mxu0 %v1669
    %1897 = vmatprep.mubr.bf16.mxu0 %v162
    %1898 = vmatmul.mubr.bf16.gmra.mrb[0].mxu0 %v161
    %v1899 = vpop.f32.mrb[0].mxu0
    %v1900 = vadd.f32 0.0, %v1899
    %v1901 = vpop.f32.mrb[0].mxu0
    %v1902 = vadd.f32 0.0, %v1901
    %v1903 = vpop.f32.mrb[0].mxu0
    %v1904 = vpop.f32.mrb[0].mxu0
    %1905 = vdwg.mxu0
    %1906 = vmatprep.subr.bf16.mxu0 %v1674
    %1907 = vmatpush1.bf16.msra.mxu0 %v1673
    %1908 = vmatprep.subr.bf16.mxu0 %v1678
    %1909 = vmatpush1.bf16.msra.mxu0 %v1677
    %1910 = vmatprep.subr.bf16.mxu0 %v1682
    %1911 = vmatpush1.bf16.msra.mxu0 %v1681
    %1912 = vmatprep.subr.bf16.mxu0 %v1686
    %1913 = vmatpush1.bf16.msra.mxu0 %v1685
    %1914 = vmatprep.subr.bf16.mxu0 %v1690
    %1915 = vmatpush1.bf16.msra.mxu0 %v1689
    %1916 = vmatprep.subr.bf16.mxu0 %v1694
    %1917 = vmatpush1.bf16.msra.mxu0 %v1693
    %1918 = vmatprep.subr.bf16.mxu0 %v1698
    %1919 = vmatpush1.bf16.msra.mxu0 %v1697
    %1920 = vmatprep.subr.bf16.mxu0 %v1702
    %1921 = vmatpush1.bf16.msra.mxu0 %v1701
    %1922 = vmatprep.subr.bf16.mxu0 %v1706
    %1923 = vmatpush1.bf16.msra.mxu0 %v1705
    %1924 = vmatprep.subr.bf16.mxu0 %v1710
    %1925 = vmatpush1.bf16.msra.mxu0 %v1709
    %1926 = vmatprep.subr.bf16.mxu0 %v1714
    %1927 = vmatpush1.bf16.msra.mxu0 %v1713
    %1928 = vmatprep.subr.bf16.mxu0 %v1718
    %1929 = vmatpush1.bf16.msra.mxu0 %v1717
    %1930 = vmatprep.subr.bf16.mxu0 %v1722
    %1931 = vmatpush1.bf16.msra.mxu0 %v1721
    %1932 = vmatprep.subr.bf16.mxu0 %v1726
    %1933 = vmatpush1.bf16.msra.mxu0 %v1725
    %1934 = vmatprep.subr.bf16.mxu0 %v1730
    %1935 = vmatpush1.bf16.msra.mxu0 %v1729
    %1936 = vmatprep.subr.bf16.mxu0 %v1734
    %1937 = vmatpush1.bf16.msra.mxu0 %v1733
    %1938 = vmatprep.mubr.bf16.mxu0 %v164
    %1939 = vmatmul.mubr.bf16.gmra.mrb[0].mxu0 %v163
    %v1940 = vpop.f32.mrb[0].mxu0
    %v1941 = vadd.f32 %v1900, %v1940
    %v1942 = vpop.f32.mrb[0].mxu0
    %v1943 = vadd.f32 %v1902, %v1942
    %v1944 = vpop.f32.mrb[0].mxu0
    %v1945 = vpop.f32.mrb[0].mxu0
    %1946 = vdwg.mxu0
    %1947 = vmatprep.subr.bf16.mxu0 %v1612
    %1948 = vmatpush1.bf16.msra.mxu0 %v1611
    %1949 = vmatprep.subr.bf16.mxu0 %v1616
    %1950 = vmatpush1.bf16.msra.mxu0 %v1615
    %1951 = vmatprep.subr.bf16.mxu0 %v1620
    %1952 = vmatpush1.bf16.msra.mxu0 %v1619
    %1953 = vmatprep.subr.bf16.mxu0 %v1624
    %1954 = vmatpush1.bf16.msra.mxu0 %v1623
    %1955 = vmatprep.subr.bf16.mxu0 %v1628
    %1956 = vmatpush1.bf16.msra.mxu0 %v1627
    %1957 = vmatprep.subr.bf16.mxu0 %v1632
    %1958 = vmatpush1.bf16.msra.mxu0 %v1631
    %1959 = vmatprep.subr.bf16.mxu0 %v1636
    %1960 = vmatpush1.bf16.msra.mxu0 %v1635
    %1961 = vmatprep.subr.bf16.mxu0 %v1640
    %1962 = vmatpush1.bf16.msra.mxu0 %v1639
    %1963 = vmatprep.subr.bf16.mxu0 %v1644
    %1964 = vmatpush1.bf16.msra.mxu0 %v1643
    %1965 = vmatprep.subr.bf16.mxu0 %v1648
    %1966 = vmatpush1.bf16.msra.mxu0 %v1647
    %1967 = vmatprep.subr.bf16.mxu0 %v1652
    %1968 = vmatpush1.bf16.msra.mxu0 %v1651
    %1969 = vmatprep.subr.bf16.mxu0 %v1656
    %1970 = vmatpush1.bf16.msra.mxu0 %v1655
    %1971 = vmatprep.subr.bf16.mxu0 %v1660
    %1972 = vmatpush1.bf16.msra.mxu0 %v1659
    %1973 = vmatprep.subr.bf16.mxu0 %v1664
    %1974 = vmatpush1.bf16.msra.mxu0 %v1663
    %1975 = vmatprep.subr.bf16.mxu0 %v1668
    %1976 = vmatpush1.bf16.msra.mxu0 %v1667
    %1977 = vmatprep.subr.bf16.mxu0 %v1672
    %1978 = vmatpush1.bf16.msra.mxu0 %v1671
    %1979 = vmatprep.mubr.bf16.mxu0 %v162
    %1980 = vmatmul.mubr.bf16.gmra.mrb[0].mxu0 %v161
    %v1981 = vpop.f32.mrb[0].mxu0
    %v1982 = vadd.f32 0.0, %v1981
    %v1983 = vpop.f32.mrb[0].mxu0
    %v1984 = vadd.f32 0.0, %v1983
    %v1985 = vpop.f32.mrb[0].mxu0
    %v1986 = vpop.f32.mrb[0].mxu0
    %1987 = vdwg.mxu0
    %1988 = vmatprep.subr.bf16.mxu0 %v1676
    %1989 = vmatpush1.bf16.msra.mxu0 %v1675
    %1990 = vmatprep.subr.bf16.mxu0 %v1680
    %1991 = vmatpush1.bf16.msra.mxu0 %v1679
    %1992 = vmatprep.subr.bf16.mxu0 %v1684
    %1993 = vmatpush1.bf16.msra.mxu0 %v1683
    %1994 = vmatprep.subr.bf16.mxu0 %v1688
    %1995 = vmatpush1.bf16.msra.mxu0 %v1687
    %1996 = vmatprep.subr.bf16.mxu0 %v1692
    %1997 = vmatpush1.bf16.msra.mxu0 %v1691
    %1998 = vmatprep.subr.bf16.mxu0 %v1696
    %1999 = vmatpush1.bf16.msra.mxu0 %v1695
    %2000 = vmatprep.subr.bf16.mxu0 %v1700
    %2001 = vmatpush1.bf16.msra.mxu0 %v1699
    %2002 = vmatprep.subr.bf16.mxu0 %v1704
    %2003 = vmatpush1.bf16.msra.mxu0 %v1703
    %2004 = vmatprep.subr.bf16.mxu0 %v1708
    %2005 = vmatpush1.bf16.msra.mxu0 %v1707
    %2006 = vmatprep.subr.bf16.mxu0 %v1712
    %2007 = vmatpush1.bf16.msra.mxu0 %v1711
    %2008 = vmatprep.subr.bf16.mxu0 %v1716
    %2009 = vmatpush1.bf16.msra.mxu0 %v1715
    %2010 = vmatprep.subr.bf16.mxu0 %v1720
    %2011 = vmatpush1.bf16.msra.mxu0 %v1719
    %2012 = vmatprep.subr.bf16.mxu0 %v1724
    %2013 = vmatpush1.bf16.msra.mxu0 %v1723
    %2014 = vmatprep.subr.bf16.mxu0 %v1728
    %2015 = vmatpush1.bf16.msra.mxu0 %v1727
    %2016 = vmatprep.subr.bf16.mxu0 %v1732
    %2017 = vmatpush1.bf16.msra.mxu0 %v1731
    %2018 = vmatprep.subr.bf16.mxu0 %v1736
    %2019 = vmatpush1.bf16.msra.mxu0 %v1735
    %2020 = vmatprep.mubr.bf16.mxu0 %v164
    %2021 = vmatmul.mubr.bf16.gmra.mrb[0].mxu0 %v163
    %v2022 = vpop.f32.mrb[0].mxu0
    %v2023 = vadd.f32 %v1982, %v2022
    %v2024 = vpop.f32.mrb[0].mxu0
    %v2025 = vadd.f32 %v1984, %v2024
    %v2026 = vpop.f32.mrb[0].mxu0
    %v2027 = vpop.f32.mrb[0].mxu0
    %2028 = vdwg.mxu0
    %v2029 = vmul.f32 %v1009, %v1009
    %v2030 = vmul.f32 %v1011, %v1011
    %v2031 = vmul.f32 %v1091, %v1091
    %v2032 = vmul.f32 %v1093, %v1093
    %v2033 = vmul.f32 %v1941, %v1941
    %v2034 = vmul.f32 %v1943, %v1943
    %v2035 = vmul.f32 %v2023, %v2023
    %v2036 = vmul.f32 %v2025, %v2025
    %v2037 = vadd.f32 %v2029, %v2033
    %v2038 = vadd.f32 %v2030, %v2034
    %v2039 = vadd.f32 %v2031, %v2035
    %v2040 = vadd.f32 %v2032, %v2036
    %v2041 = vrsqrt.pop %v2037
    %v2042 = vmul.f32 %v2037, %v2041
    %vm2043 = vcmp.eq.f32.partialorder %v2037, inf
    %v2044 = vsel %vm2043, %v2037, %v2042
    %vm2045 = vcmp.eq.f32.partialorder %v2037, 0.0
    %v2046 = vand.u32 %v2037, 2147483648
    %v2047 = vsel %vm2045, %v2046, %v2044
    %v2048 = vrsqrt.pop %v2038
    %v2049 = vmul.f32 %v2038, %v2048
    %vm2050 = vcmp.eq.f32.partialorder %v2038, inf
    %v2051 = vsel %vm2050, %v2038, %v2049
    %vm2052 = vcmp.eq.f32.partialorder %v2038, 0.0
    %v2053 = vand.u32 %v2038, 2147483648
    %v2054 = vsel %vm2052, %v2053, %v2051
    %v2055 = vrsqrt.pop %v2039
    %v2056 = vmul.f32 %v2039, %v2055
    %vm2057 = vcmp.eq.f32.partialorder %v2039, inf
    %v2058 = vsel %vm2057, %v2039, %v2056
    %vm2059 = vcmp.eq.f32.partialorder %v2039, 0.0
    %v2060 = vand.u32 %v2039, 2147483648
    %v2061 = vsel %vm2059, %v2060, %v2058
    %v2062 = vrsqrt.pop %v2040
    %v2063 = vmul.f32 %v2040, %v2062
    %vm2064 = vcmp.eq.f32.partialorder %v2040, inf
    %v2065 = vsel %vm2064, %v2040, %v2063
    %vm2066 = vcmp.eq.f32.partialorder %v2040, 0.0
    %v2067 = vand.u32 %v2040, 2147483648
    %v2068 = vsel %vm2066, %v2067, %v2065
    %v2069 = vmul.f32 %v2047, %v75
    %v2070 = vmul.f32 %v2054, %v75
    %v2071 = vmul.f32 %v2061, %v75
    %v2072 = vmul.f32 %v2068, %v75
    %v2073 = vsel %vm111, %v2069, 0.0
    %v2074 = vsel %vm111, %v2070, 0.0
    %v2075 = vadd.f32 %v2073, %v2074
    %v2076 = vsel %vm111, %v2071, 0.0
    %v2077 = vadd.f32 %v2075, %v2076
    %v2078 = vsel %vm111, %v2072, 0.0
    %v2079 = vadd.f32 %v2077, %v2078
    %2080 = vadd.xlane.f32.xlu0 %v2079
    %v2081 = vpop.xlane.xlu0 %2080
    %v2082 = vrot.slane %v2081, 4
    %v2083 = vadd.f32 %v2081, %v2082
    %v2084 = vrot.slane %v2083, 2
    %v2085 = vadd.f32 %v2083, %v2084
    %v2086 = vrot.slane %v2085, 1
    %v2087 = vadd.f32 %v2085, %v2086
    %s2088 = vtos %v2087
    %s2089 = smul.f32 %s2088, 0.25
    %v2090 = vlaneseq
    %v2091 = vshrl.u32 %v2090, 7
    %v2092 = vlaneseq
    %v2093 = vand.u32 %v2092, 127
    %vm2094 = vcmp.eq.s32.totalorder %v2091, 0
    %vm2095 = vcmp.eq.s32.totalorder %v2093, 0
    %vm2096 = vmand %vm2094, %vm2095
    %v2097 = vstv %s128
    %v2098 = vsel %vm2096, %v2097, 0.0
    %vm2099 = vcmp.eq.s32.totalorder %v2093, 1
    %vm2100 = vmand %vm2094, %vm2099
    %v2101 = vstv %s2089
    %v2102 = vsel %vm2100, %v2101, 0.0
    %v2103 = vadd.f32 %v2098, %v2102
    %vm2104 = vcmp.eq.s32.totalorder %v2093, 2
    %vm2105 = vmand %vm2094, %vm2104
    %v2106 = vstv %s138
    %v2107 = vsel %vm2105, %v2106, 0.0
    %v2108 = vadd.f32 %v2103, %v2107
    %2109 = vst [vmem:[#allocation10] sm:$0xff] %v2108
    // Predicated region
    $region38: #{tpu_custom_call.1} parent=1 // pred_check
      _
    $region39: #{tpu_custom_call.1} parent=1 // pred_check_branch
      %2111 = sbr.rel (0) target = $region41
    $region40: #{tpu_custom_call.1} parent=1 // pred_region
      %s2113 = ssub.s32 128, 128
      %2114 = vsyncadd [#allocation4], %s2113
      %s2116 = sshll.u32 [#allocation10], 4
      %s2117 = int_to_ptr.vmem [resolvable:$true] %s2116
      %2119 = dma.vmem_to_hbm [thread:$0]  %s2117, 128, %s5, [#allocation4]
    $region41: #{tpu_custom_call.1} parent=1 // pred_fallthru
      _
    // Predicated region
    $region42: #{tpu_custom_call.1} parent=1 // pred_check
      _
    $region43: #{tpu_custom_call.1} parent=1 // pred_check_branch
      %2121 = sbr.rel (0) target = $region45
    $region44: #{tpu_custom_call.1} parent=1 // pred_region
      %2122 = dma.done [#allocation4], 128
    $region45: #{tpu_custom_call.1} parent=1 // pred_fallthru
      _
    %2123 = vsyncpa [#allocation3], 1
    %2124 = vsyncpa [#allocation6], 1
    %2125 = vsyncpa [#allocation9], 1
    %2126 = vsyncpa [#allocation4], 1

</llo_original>
